<compile_context>
chip_gen: v7x
topology: tpu7x:2x2x1
jax: 0.10.0
libtpu: 0.0.40
codegen_flags: <defaults>
</compile_context>

<pallas_src>
import math
import jax
import jax.numpy as jnp
from jax.experimental import pallas as pl
from jax.experimental.pallas import tpu as pltpu


def decoder_kernel(x_ref, w1_ref, b1_ref, w2_ref, b2_ref, w3_ref, b3_ref, o_ref):
    # Three MXU matmuls (bf16 in, f32 accumulate) + VPU bias-add / ReLU, all on
    # VMEM-resident tiles.  Weights have constant index_maps so they are fetched once.
    x = x_ref[...]                                                         # bf16 [bm, K]
    h1 = jnp.dot(x, w1_ref[...], preferred_element_type=jnp.float32) + b1_ref[...]
    h1 = jnp.maximum(h1, 0.0).astype(jnp.bfloat16)
    h2 = jnp.dot(h1, w2_ref[...], preferred_element_type=jnp.float32) + b2_ref[...]
    h2 = jnp.maximum(h2, 0.0).astype(jnp.bfloat16)
    out = jnp.dot(h2, w3_ref[...], preferred_element_type=jnp.float32) + b3_ref[...]
    o_ref[...] = out.astype(o_ref.dtype)


def _round_up(x, m):
    return pl.cdiv(x, m) * m


def decoder_forward(x, params, *, bm=256):
    """x: [B, code_dim] float32. params: dict of w1,b1,w2,b2,w3,b3 (f32, [in,out])."""
    B, code_dim = x.shape
    w1, b1 = params["w1"], params["b1"]
    w2, b2 = params["w2"], params["b2"]
    w3, b3 = params["w3"], params["b3"]
    input_dim = w3.shape[1]
    h1_dim = w1.shape[1]
    h2_dim = w2.shape[1]

    # Pad batch to a multiple of the batch tile.
    Bp = _round_up(B, bm)
    if Bp != B:
        x = jnp.pad(x, ((0, Bp - B), (0, 0)))

    # Pad the output feature dim to a multiple of 128 for lane-dense stores.
    Np = _round_up(input_dim, 128)
    if Np != input_dim:
        w3 = jnp.pad(w3, ((0, 0), (0, Np - input_dim)))
        b3 = jnp.pad(b3, ((0, Np - input_dim),))

    # bf16 for MXU inputs; biases stay f32 and broadcast over the batch tile.
    x_bf = x.astype(jnp.bfloat16)
    w1_bf = w1.astype(jnp.bfloat16)
    w2_bf = w2.astype(jnp.bfloat16)
    w3_bf = w3.astype(jnp.bfloat16)
    b1_2d = b1.reshape(1, -1).astype(jnp.float32)
    b2_2d = b2.reshape(1, -1).astype(jnp.float32)
    b3_2d = b3.reshape(1, -1).astype(jnp.float32)

    grid = (Bp // bm,)

    flops = 2 * Bp * (code_dim * h1_dim + h1_dim * h2_dim + h2_dim * Np)
    bytes_accessed = (
        x_bf.size * 2
        + (w1_bf.size + w2_bf.size + w3_bf.size) * 2
        + (b1_2d.size + b2_2d.size + b3_2d.size) * 4
        + Bp * Np * 4
    )

    out = pl.pallas_call(
        decoder_kernel,
        out_shape=jax.ShapeDtypeStruct((Bp, Np), jnp.float32),
        grid_spec=pltpu.PrefetchScalarGridSpec(
            num_scalar_prefetch=0,
            grid=grid,
            in_specs=[
                pl.BlockSpec((bm, code_dim), lambda i: (i, 0)),     # x tile
                pl.BlockSpec(w1_bf.shape, lambda i: (0, 0)),        # w1 (full, resident)
                pl.BlockSpec(b1_2d.shape, lambda i: (0, 0)),        # b1
                pl.BlockSpec(w2_bf.shape, lambda i: (0, 0)),        # w2
                pl.BlockSpec(b2_2d.shape, lambda i: (0, 0)),        # b2
                pl.BlockSpec(w3_bf.shape, lambda i: (0, 0)),        # w3 (128-padded cols)
                pl.BlockSpec(b3_2d.shape, lambda i: (0, 0)),        # b3
            ],
            out_specs=pl.BlockSpec((bm, Np), lambda i: (i, 0)),
        ),
        compiler_params=pltpu.CompilerParams(
            dimension_semantics=("parallel",),
        ),
        cost_estimate=pl.CostEstimate(
            flops=flops, transcendentals=0, bytes_accessed=bytes_accessed
        ),
    )(x_bf, w1_bf, b1_2d, w2_bf, b2_2d, w3_bf, b3_2d)

    return out[:B, :input_dim]


def xavier_uniform(key, fan_in, fan_out, gain):
    bound = gain * math.sqrt(6.0 / (fan_in + fan_out))
    # stored as [in, out] (transpose of torch's [out, in]); same distribution
    return jax.random.uniform(key, (fan_in, fan_out), jnp.float32, -bound, bound)


def make_params(key, input_dim, code_dim):
    gain = math.sqrt(2.0)  # nn.init.calculate_gain('relu')
    k1, k2, k3 = jax.random.split(key, 3)
    return {
        "w1": xavier_uniform(k1, code_dim, 256, gain),
        "b1": jnp.zeros((256,), jnp.float32),
        "w2": xavier_uniform(k2, 256, 512, gain),
        "b2": jnp.zeros((512,), jnp.float32),
        "w3": xavier_uniform(k3, 512, input_dim, gain),
        "b3": jnp.zeros((input_dim,), jnp.float32),
    }


def decoder_reference_f32(x, params):
    h1 = jax.nn.relu(x @ params["w1"] + params["b1"])
    h2 = jax.nn.relu(h1 @ params["w2"] + params["b2"])
    return h2 @ params["w3"] + params["b3"]


def decoder_reference_bf16(x, params):
    # Matches the kernel's numerics: bf16 matmul inputs, f32 accumulation.
    def mm(a, w):
        return jnp.dot(a.astype(jnp.bfloat16), w.astype(jnp.bfloat16),
                       preferred_element_type=jnp.float32)
    h1 = jax.nn.relu(mm(x, params["w1"]) + params["b1"])
    h2 = jax.nn.relu(mm(h1, params["w2"]) + params["b2"])
    return mm(h2, params["w3"]) + params["b3"]


if __name__ == "__main__":
    input_dim = 64
    code_dim = 32
    batch = 2

    key = jax.random.PRNGKey(0)
    kp, kx = jax.random.split(key)
    params = make_params(kp, input_dim, code_dim)
    x = jax.random.normal(kx, (batch, code_dim), jnp.float32)

    out = decoder_forward(x, params)
    out = jax.block_until_ready(out)
    assert out.shape == (batch, input_dim)

    # Numerics-matched reference (bf16 matmul inputs, f32 accumulation).
    ref_bf16 = decoder_reference_bf16(x, params)
    assert jnp.allclose(out, ref_bf16, atol=1e-2, rtol=1e-2), "mismatch vs bf16 reference"

    # Sanity check against full-f32 math with a bf16-appropriate tolerance.
    ref_f32 = decoder_reference_f32(x, params)
    assert jnp.allclose(out, ref_f32, atol=5e-2, rtol=5e-2), "mismatch vs f32 reference"

    print("KERNEL_OK")
</pallas_src>

<mosaic_0001>
module attributes {stable_mosaic.version = 11 : i64} {
  func.func @decoder_kernel(%arg0: i32, %arg1: memref<256x32xbf16, #tpu.memory_space<vmem>>, %arg2: memref<32x256xbf16, #tpu.memory_space<vmem>>, %arg3: memref<1x256xf32, #tpu.memory_space<vmem>>, %arg4: memref<256x512xbf16, #tpu.memory_space<vmem>>, %arg5: memref<1x512xf32, #tpu.memory_space<vmem>>, %arg6: memref<512x128xbf16, #tpu.memory_space<vmem>>, %arg7: memref<1x128xf32, #tpu.memory_space<vmem>>, %arg8: memref<256x128xf32, #tpu.memory_space<vmem>>) attributes {dimension_semantics = [#tpu.dimension_semantics<parallel>], iteration_bounds = array<i64: 1>, scalar_prefetch = 0 : i64, scratch_operands = 0 : i64, tpu.core_type = #tpu.core_type<tc>, window_params = [{transform_indices = @transform_0, window_bounds = array<i64: 256, 32>}, {pipeline_mode = #tpu.pipeline_mode<synchronous>, transform_indices = @transform_1, window_bounds = array<i64: 32, 256>}, {pipeline_mode = #tpu.pipeline_mode<synchronous>, transform_indices = @transform_2, window_bounds = array<i64: 1, 256>}, {pipeline_mode = #tpu.pipeline_mode<synchronous>, transform_indices = @transform_3, window_bounds = array<i64: 256, 512>}, {pipeline_mode = #tpu.pipeline_mode<synchronous>, transform_indices = @transform_4, window_bounds = array<i64: 1, 512>}, {pipeline_mode = #tpu.pipeline_mode<synchronous>, transform_indices = @transform_5, window_bounds = array<i64: 512, 128>}, {pipeline_mode = #tpu.pipeline_mode<synchronous>, transform_indices = @transform_6, window_bounds = array<i64: 1, 128>}, {transform_indices = @transform_7, window_bounds = array<i64: 256, 128>}]} {
    %c0 = arith.constant 0 : index
    %c0_0 = arith.constant 0 : index
    %0 = vector.load %arg1[%c0, %c0_0] : memref<256x32xbf16, #tpu.memory_space<vmem>>, vector<256x32xbf16>
    %c0_1 = arith.constant 0 : index
    %c0_2 = arith.constant 0 : index
    %1 = vector.load %arg2[%c0_1, %c0_2] : memref<32x256xbf16, #tpu.memory_space<vmem>>, vector<32x256xbf16>
    %cst = arith.constant dense<0.000000e+00> : vector<256x256xf32>
    %2 = tpu.matmul %0, %1, %cst {dimension_numbers = #tpu.dot_dimension_numbers<[1], [0], [0], [1], [0, 0, 1, 1], [], []>} : vector<256x32xbf16>, vector<32x256xbf16>, vector<256x256xf32> -> vector<256x256xf32>
    %c0_3 = arith.constant 0 : index
    %c0_4 = arith.constant 0 : index
    %3 = vector.load %arg3[%c0_3, %c0_4] : memref<1x256xf32, #tpu.memory_space<vmem>>, vector<1x256xf32>
    %4 = vector.broadcast %3 : vector<1x256xf32> to vector<256x256xf32>
    %5 = arith.addf %2, %4 : vector<256x256xf32>
    %cst_5 = arith.constant 0.000000e+00 : f32
    %6 = vector.broadcast %cst_5 : f32 to vector<256x256xf32>
    %7 = arith.maximumf %5, %6 : vector<256x256xf32>
    %8 = arith.truncf %7 : vector<256x256xf32> to vector<256x256xbf16>
    %c0_6 = arith.constant 0 : index
    %c0_7 = arith.constant 0 : index
    %9 = vector.load %arg4[%c0_6, %c0_7] : memref<256x512xbf16, #tpu.memory_space<vmem>>, vector<256x512xbf16>
    %cst_8 = arith.constant dense<0.000000e+00> : vector<256x512xf32>
    %10 = tpu.matmul %8, %9, %cst_8 {dimension_numbers = #tpu.dot_dimension_numbers<[1], [0], [0], [1], [0, 0, 1, 1], [], []>} : vector<256x256xbf16>, vector<256x512xbf16>, vector<256x512xf32> -> vector<256x512xf32>
    %c0_9 = arith.constant 0 : index
    %c0_10 = arith.constant 0 : index
    %11 = vector.load %arg5[%c0_9, %c0_10] : memref<1x512xf32, #tpu.memory_space<vmem>>, vector<1x512xf32>
    %12 = vector.broadcast %11 : vector<1x512xf32> to vector<256x512xf32>
    %13 = arith.addf %10, %12 : vector<256x512xf32>
    %cst_11 = arith.constant 0.000000e+00 : f32
    %14 = vector.broadcast %cst_11 : f32 to vector<256x512xf32>
    %15 = arith.maximumf %13, %14 : vector<256x512xf32>
    %16 = arith.truncf %15 : vector<256x512xf32> to vector<256x512xbf16>
    %c0_12 = arith.constant 0 : index
    %c0_13 = arith.constant 0 : index
    %17 = vector.load %arg6[%c0_12, %c0_13] : memref<512x128xbf16, #tpu.memory_space<vmem>>, vector<512x128xbf16>
    %cst_14 = arith.constant dense<0.000000e+00> : vector<256x128xf32>
    %18 = tpu.matmul %16, %17, %cst_14 {dimension_numbers = #tpu.dot_dimension_numbers<[1], [0], [0], [1], [0, 0, 1, 1], [], []>} : vector<256x512xbf16>, vector<512x128xbf16>, vector<256x128xf32> -> vector<256x128xf32>
    %c0_15 = arith.constant 0 : index
    %c0_16 = arith.constant 0 : index
    %19 = vector.load %arg7[%c0_15, %c0_16] : memref<1x128xf32, #tpu.memory_space<vmem>>, vector<1x128xf32>
    %20 = vector.broadcast %19 : vector<1x128xf32> to vector<256x128xf32>
    %21 = arith.addf %18, %20 : vector<256x128xf32>
    %c0_17 = arith.constant 0 : index
    %c0_18 = arith.constant 0 : index
    %22 = vector.load %arg8[%c0_17, %c0_18] : memref<256x128xf32, #tpu.memory_space<vmem>>, vector<256x128xf32>
    tpu.vector_store %arg8[%c0_17, %c0_18], %21 {strides = array<i32>} : memref<256x128xf32, #tpu.memory_space<vmem>>, vector<256x128xf32>,
    return
  }
  func.func @transform_0(%arg0: i32) -> (i32, i32) {
    %c0_i32 = arith.constant 0 : i32
    %c0_i32_0 = arith.constant 0 : i32
    return %arg0, %c0_i32 : i32, i32
  }
  func.func @transform_1(%arg0: i32) -> (i32, i32) {
    %c0_i32 = arith.constant 0 : i32
    %c0_i32_0 = arith.constant 0 : i32
    %c0_i32_1 = arith.constant 0 : i32
    return %c0_i32, %c0_i32_0 : i32, i32
  }
  func.func @transform_2(%arg0: i32) -> (i32, i32) {
    %c0_i32 = arith.constant 0 : i32
    %c0_i32_0 = arith.constant 0 : i32
    %c0_i32_1 = arith.constant 0 : i32
    return %c0_i32, %c0_i32_0 : i32, i32
  }
  func.func @transform_3(%arg0: i32) -> (i32, i32) {
    %c0_i32 = arith.constant 0 : i32
    %c0_i32_0 = arith.constant 0 : i32
    %c0_i32_1 = arith.constant 0 : i32
    return %c0_i32, %c0_i32_0 : i32, i32
  }
  func.func @transform_4(%arg0: i32) -> (i32, i32) {
    %c0_i32 = arith.constant 0 : i32
    %c0_i32_0 = arith.constant 0 : i32
    %c0_i32_1 = arith.constant 0 : i32
    return %c0_i32, %c0_i32_0 : i32, i32
  }
  func.func @transform_5(%arg0: i32) -> (i32, i32) {
    %c0_i32 = arith.constant 0 : i32
    %c0_i32_0 = arith.constant 0 : i32
    %c0_i32_1 = arith.constant 0 : i32
    return %c0_i32, %c0_i32_0 : i32, i32
  }
  func.func @transform_6(%arg0: i32) -> (i32, i32) {
    %c0_i32 = arith.constant 0 : i32
    %c0_i32_0 = arith.constant 0 : i32
    %c0_i32_1 = arith.constant 0 : i32
    return %c0_i32, %c0_i32_0 : i32, i32
  }
  func.func @transform_7(%arg0: i32) -> (i32, i32) {
    %c0_i32 = arith.constant 0 : i32
    %c0_i32_0 = arith.constant 0 : i32
    return %arg0, %c0_i32 : i32, i32
  }
}

</mosaic_0001>

<llo_original>
// kernel: tpu_custom_call.1
$region0: #{tpu_custom_call.1}
  #allocation0 [shape = 'u32[]', space=smem, size = 0x4, offset = 0x4, fixed_abs, tag = 'smem constant byte address 0x4 - core index']
  #allocation1 [shape = 'u32[144,128]{1,0:T(1,128)}', space=vmem, size = 0x12000, scoped, tag = 'internal scratch']
  %s0 = inlined_call_operand.vmem [shape: bf16[256,32], index: 0, kind: input, shape index: {}]
  %s1 = inlined_call_operand.vmem [shape: bf16[32,256], index: 1, kind: input, shape index: {}]
  %s2 = inlined_call_operand.vmem [shape: f32[1,256], index: 2, kind: input, shape index: {}]
  %s3 = inlined_call_operand.hbm [shape: bf16[256,512], index: 3, kind: input, shape index: {}]
  %s4 = inlined_call_operand.vmem [shape: f32[1,512], index: 4, kind: input, shape index: {}]
  %s5 = inlined_call_operand.hbm [shape: bf16[512,128], index: 5, kind: input, shape index: {}]
  %s6 = inlined_call_operand.vmem [shape: f32[1,128], index: 6, kind: input, shape index: {}]
  %s7 = inlined_call_operand.hbm [shape: f32[256,128], index: 7, kind: output, shape index: {}]
  %s8 = sld [smem:[#allocation0]]
  $region46: #{tpu_custom_call.1} parent=0
    _
  %s10 = ssub.s32 1, %s8
  %s11 = scalar_select 0, %s10, %s8
  $region1: #{tpu_custom_call.1} parent=0
    #allocation2 [shape = 'u8[262144]{0}', space=vmem, size = 0x40000, scoped, tag = 'input window, operand 3, single buffered']
    #allocation3 [shape = 's32[1]{0}', space=sflag, size = 0x4, scoped, tag = 'scoped memory for tpu_custom_call.1']
    #allocation4 [shape = 's32[1]{0}', space=sflag, size = 0x4, scoped, tag = 'scoped memory for tpu_custom_call.1']
    #allocation5 [shape = 'u8[131072]{0}', space=vmem, size = 0x20000, scoped, tag = 'input window, operand 5, single buffered']
    #allocation6 [shape = 's32[1]{0}', space=sflag, size = 0x4, scoped, tag = 'scoped memory for tpu_custom_call.1']
    #allocation7 [shape = 'u8[131072]{0}', space=vmem, size = 0x20000, scoped, tag = 'output window, operand 0, single buffered']
    %12 = vsyncpa [#allocation3], 0
    %13 = vsyncpa [#allocation6], 0
    %14 = vsyncpa [#allocation4], 0
    // Predicated region
    $region2: #{tpu_custom_call.1} parent=1 // pred_check
      _
    $region3: #{tpu_custom_call.1} parent=1 // pred_check_branch
      %16 = sbr.rel (0) target = $region5
    $region4: #{tpu_custom_call.1} parent=1 // pred_region
      _
    $region5: #{tpu_custom_call.1} parent=1 // pred_fallthru
      _
    // Predicated region
    $region6: #{tpu_custom_call.1} parent=1 // pred_check
      _
    $region7: #{tpu_custom_call.1} parent=1 // pred_check_branch
      %18 = sbr.rel (0) target = $region9
    $region8: #{tpu_custom_call.1} parent=1 // pred_region
      _
    $region9: #{tpu_custom_call.1} parent=1 // pred_fallthru
      _
    // Predicated region
    $region10: #{tpu_custom_call.1} parent=1 // pred_check
      _
    $region11: #{tpu_custom_call.1} parent=1 // pred_check_branch
      %20 = sbr.rel (0) target = $region13
    $region12: #{tpu_custom_call.1} parent=1 // pred_region
      _
    $region13: #{tpu_custom_call.1} parent=1 // pred_fallthru
      _
    // Predicated region
    $region14: #{tpu_custom_call.1} parent=1 // pred_check
      _
    $region15: #{tpu_custom_call.1} parent=1 // pred_check_branch
      %22 = sbr.rel (0) target = $region17
    $region16: #{tpu_custom_call.1} parent=1 // pred_region
      %s24 = ssub.s32 8192, 8192
      %25 = vsyncadd [#allocation3], %s24
      %s26 = sshll.u32 [#allocation2], 4
      %s27 = int_to_ptr.vmem [resolvable:$true] %s26
      %32 = dma.hbm_to_vmem [thread:$0]  %s3, 8192, %s27, [#allocation3], 256, 256, 16
    $region17: #{tpu_custom_call.1} parent=1 // pred_fallthru
      _
    // Predicated region
    $region18: #{tpu_custom_call.1} parent=1 // pred_check
      _
    $region19: #{tpu_custom_call.1} parent=1 // pred_check_branch
      %34 = sbr.rel (0) target = $region21
    $region20: #{tpu_custom_call.1} parent=1 // pred_region
      _
    $region21: #{tpu_custom_call.1} parent=1 // pred_fallthru
      _
    // Predicated region
    $region22: #{tpu_custom_call.1} parent=1 // pred_check
      _
    $region23: #{tpu_custom_call.1} parent=1 // pred_check_branch
      %36 = sbr.rel (0) target = $region25
    $region24: #{tpu_custom_call.1} parent=1 // pred_region
      %s38 = ssub.s32 4096, 4096
      %39 = vsyncadd [#allocation6], %s38
      %s40 = sshll.u32 [#allocation5], 4
      %s41 = int_to_ptr.vmem [resolvable:$true] %s40
      %46 = dma.hbm_to_vmem [thread:$0]  %s5, 4096, %s41, [#allocation6], 64, 64, 4
    $region25: #{tpu_custom_call.1} parent=1 // pred_fallthru
      _
    // Predicated region
    $region26: #{tpu_custom_call.1} parent=1 // pred_check
      _
    $region27: #{tpu_custom_call.1} parent=1 // pred_check_branch
      %48 = sbr.rel (0) target = $region29
    $region28: #{tpu_custom_call.1} parent=1 // pred_region
      _
    $region29: #{tpu_custom_call.1} parent=1 // pred_fallthru
      _
    // Predicated region
    $region30: #{tpu_custom_call.1} parent=1 // pred_check
      _
    $region31: #{tpu_custom_call.1} parent=1 // pred_check_branch
      %50 = sbr.rel (0) target = $region33
    $region32: #{tpu_custom_call.1} parent=1 // pred_region
      %51 = dma.done [#allocation3], 8192
    $region33: #{tpu_custom_call.1} parent=1 // pred_fallthru
      _
    // Predicated region
    $region34: #{tpu_custom_call.1} parent=1 // pred_check
      _
    $region35: #{tpu_custom_call.1} parent=1 // pred_check_branch
      %53 = sbr.rel (0) target = $region37
    $region36: #{tpu_custom_call.1} parent=1 // pred_region
      %54 = dma.done [#allocation6], 4096
    $region37: #{tpu_custom_call.1} parent=1 // pred_fallthru
      _
    %v56 = vld [vmem:[%s0] sm:$0xf]
    %v57 = vld [vmem:[%s0 + $0x4] sm:$0xf]
    %v58 = vld [vmem:[%s0 + $0x8] sm:$0xf]
    %v59 = vld [vmem:[%s0 + $0xc] sm:$0xf]
    %v60 = vld [vmem:[%s0 + $0x10] sm:$0xf]
    %v61 = vld [vmem:[%s0 + $0x14] sm:$0xf]
    %v62 = vld [vmem:[%s0 + $0x18] sm:$0xf]
    %v63 = vld [vmem:[%s0 + $0x1c] sm:$0xf]
    %v64 = vld [vmem:[%s0 + $0x20] sm:$0xf]
    %v65 = vld [vmem:[%s0 + $0x24] sm:$0xf]
    %v66 = vld [vmem:[%s0 + $0x28] sm:$0xf]
    %v67 = vld [vmem:[%s0 + $0x2c] sm:$0xf]
    %v68 = vld [vmem:[%s0 + $0x30] sm:$0xf]
    %v69 = vld [vmem:[%s0 + $0x34] sm:$0xf]
    %v70 = vld [vmem:[%s0 + $0x38] sm:$0xf]
    %v71 = vld [vmem:[%s0 + $0x3c] sm:$0xf]
    %v72 = vld [vmem:[%s0 + $0x40] sm:$0xf]
    %v73 = vld [vmem:[%s0 + $0x44] sm:$0xf]
    %v74 = vld [vmem:[%s0 + $0x48] sm:$0xf]
    %v75 = vld [vmem:[%s0 + $0x4c] sm:$0xf]
    %v76 = vld [vmem:[%s0 + $0x50] sm:$0xf]
    %v77 = vld [vmem:[%s0 + $0x54] sm:$0xf]
    %v78 = vld [vmem:[%s0 + $0x58] sm:$0xf]
    %v79 = vld [vmem:[%s0 + $0x5c] sm:$0xf]
    %v80 = vld [vmem:[%s0 + $0x60] sm:$0xf]
    %v81 = vld [vmem:[%s0 + $0x64] sm:$0xf]
    %v82 = vld [vmem:[%s0 + $0x68] sm:$0xf]
    %v83 = vld [vmem:[%s0 + $0x6c] sm:$0xf]
    %v84 = vld [vmem:[%s0 + $0x70] sm:$0xf]
    %v85 = vld [vmem:[%s0 + $0x74] sm:$0xf]
    %v86 = vld [vmem:[%s0 + $0x78] sm:$0xf]
    %v87 = vld [vmem:[%s0 + $0x7c] sm:$0xf]
    %v88 = vld [vmem:[%s1] sm:$0xff]
    %v89 = vld [vmem:[%s1 + $0x8] sm:$0xff]
    %v90 = vld [vmem:[%s1 + $0x10] sm:$0xff]
    %v91 = vld [vmem:[%s1 + $0x18] sm:$0xff]
    %v92 = vld [vmem:[%s2] sm:$0x3]
    %v94 = vlaneseq
    %v95 = vshrl.u32 %v94, 7
    %v96 = vsub.s32 0, %v95
    %v97 = vrot.slane %v92, %v96
    %v98 = vlaneseq
    %v99 = vshrl.u32 %v98, 7
    %v100 = vsub.s32 1, %v99
    %v101 = vrot.slane %v92, %v100
    %v136 = vunpack.c.l.b16 %v56
    %v137 = vunpack.c.l.b16 %v57
    %v138 = vunpack.c.l.b16 %v58
    %v139 = vunpack.c.l.b16 %v59
    %v140 = vunpack.c.l.b16 %v60
    %v141 = vunpack.c.l.b16 %v61
    %v142 = vunpack.c.l.b16 %v62
    %v143 = vunpack.c.l.b16 %v63
    %v144 = vunpack.c.l.b16 %v64
    %v145 = vunpack.c.l.b16 %v65
    %v146 = vunpack.c.l.b16 %v66
    %v147 = vunpack.c.l.b16 %v67
    %v148 = vunpack.c.l.b16 %v68
    %v149 = vunpack.c.l.b16 %v69
    %v150 = vunpack.c.l.b16 %v70
    %v151 = vunpack.c.l.b16 %v71
    %v152 = vunpack.c.l.b16 %v72
    %v153 = vunpack.c.l.b16 %v73
    %v154 = vunpack.c.l.b16 %v74
    %v155 = vunpack.c.l.b16 %v75
    %v156 = vunpack.c.l.b16 %v76
    %v157 = vunpack.c.l.b16 %v77
    %v158 = vunpack.c.l.b16 %v78
    %v159 = vunpack.c.l.b16 %v79
    %v160 = vunpack.c.l.b16 %v80
    %v161 = vunpack.c.l.b16 %v81
    %v162 = vunpack.c.l.b16 %v82
    %v163 = vunpack.c.l.b16 %v83
    %v164 = vunpack.c.l.b16 %v84
    %v165 = vunpack.c.l.b16 %v85
    %v166 = vunpack.c.l.b16 %v86
    %v167 = vunpack.c.l.b16 %v87
    %v168 = vpack.c.b16 %v137, %v136
    %v169 = vpack.c.b16 %v139, %v138
    %v170 = vpack.c.b16 %v141, %v140
    %v171 = vpack.c.b16 %v143, %v142
    %v172 = vpack.c.b16 %v145, %v144
    %v173 = vpack.c.b16 %v147, %v146
    %v174 = vpack.c.b16 %v149, %v148
    %v175 = vpack.c.b16 %v151, %v150
    %v176 = vpack.c.b16 %v153, %v152
    %v177 = vpack.c.b16 %v155, %v154
    %v178 = vpack.c.b16 %v157, %v156
    %v179 = vpack.c.b16 %v159, %v158
    %v180 = vpack.c.b16 %v161, %v160
    %v181 = vpack.c.b16 %v163, %v162
    %v182 = vpack.c.b16 %v165, %v164
    %v183 = vpack.c.b16 %v167, %v166
    %v188 = vunpack.c.l.b16 %v88
    %v189 = vunpack.c.h.b16 %v88
    %v190 = vunpack.c.l.b16 %v89
    %v191 = vunpack.c.h.b16 %v89
    %v192 = vunpack.c.l.b16 %v90
    %v193 = vunpack.c.h.b16 %v90
    %v194 = vunpack.c.l.b16 %v91
    %v195 = vunpack.c.h.b16 %v91
    %v196 = vpack.c.b16 %v190, %v188
    %v197 = vpack.c.b16 %v191, %v189
    %v198 = vpack.c.b16 %v194, %v192
    %v199 = vpack.c.b16 %v195, %v193
    %vm204 = vcmask 261120
    %v206 = vsel %vm204, %v168, 0
    %v209 = vsel %vm204, %v169, 0
    %v212 = vsel %vm204, %v170, 0
    %v215 = vsel %vm204, %v171, 0
    %v218 = vsel %vm204, %v172, 0
    %v221 = vsel %vm204, %v173, 0
    %v224 = vsel %vm204, %v174, 0
    %v227 = vsel %vm204, %v175, 0
    %v230 = vsel %vm204, %v176, 0
    %v233 = vsel %vm204, %v177, 0
    %v236 = vsel %vm204, %v178, 0
    %v239 = vsel %vm204, %v179, 0
    %v242 = vsel %vm204, %v180, 0
    %v245 = vsel %vm204, %v181, 0
    %v248 = vsel %vm204, %v182, 0
    %v251 = vsel %vm204, %v183, 0
    %253 = vmatprep.subr.bf16.mxu0 %v197
    %254 = vmatpush1.bf16.msra.mxu0 %v196
    %255 = vmatprep.subr.bf16.mxu0 %v199
    %256 = vmatpush1.bf16.msra.mxu0 %v198
    %257 = vmatprep.subr.bf16.mxu0 0
    %258 = vmatpush1.bf16.msra.mxu0 0
    %259 = vmatprep.subr.bf16.mxu0 0
    %260 = vmatpush1.bf16.msra.mxu0 0
    %261 = vmatprep.subr.bf16.mxu0 0
    %262 = vmatpush1.bf16.msra.mxu0 0
    %263 = vmatprep.subr.bf16.mxu0 0
    %264 = vmatpush1.bf16.msra.mxu0 0
    %265 = vmatprep.subr.bf16.mxu0 0
    %266 = vmatpush1.bf16.msra.mxu0 0
    %267 = vmatprep.subr.bf16.mxu0 0
    %268 = vmatpush1.bf16.msra.mxu0 0
    %269 = vmatprep.subr.bf16.mxu0 0
    %270 = vmatpush1.bf16.msra.mxu0 0
    %271 = vmatprep.subr.bf16.mxu0 0
    %272 = vmatpush1.bf16.msra.mxu0 0
    %273 = vmatprep.subr.bf16.mxu0 0
    %274 = vmatpush1.bf16.msra.mxu0 0
    %275 = vmatprep.subr.bf16.mxu0 0
    %276 = vmatpush1.bf16.msra.mxu0 0
    %277 = vmatprep.subr.bf16.mxu0 0
    %278 = vmatpush1.bf16.msra.mxu0 0
    %279 = vmatprep.subr.bf16.mxu0 0
    %280 = vmatpush1.bf16.msra.mxu0 0
    %281 = vmatprep.subr.bf16.mxu0 0
    %282 = vmatpush1.bf16.msra.mxu0 0
    %283 = vmatprep.subr.bf16.mxu0 0
    %284 = vmatpush1.bf16.msra.mxu0 0
    %285 = vmatprep.mubr.bf16.mxu0 0
    %286 = vmatmul.mubr.bf16.gmra.mrb[0].mxu0 %v206
    %v287 = vpop.f32.mrb[0].mxu0
    %v288 = vadd.f32 %v97, %v287
    %v289 = vpop.f32.mrb[0].mxu0
    %v290 = vadd.f32 %v101, %v289
    %v291 = vpop.f32.mrb[0].mxu0
    %v292 = vadd.f32 %v97, %v291
    %v293 = vpop.f32.mrb[0].mxu0
    %v294 = vadd.f32 %v101, %v293
    %295 = vmatprep.mubr.bf16.mxu0 0
    %296 = vmatmul.mubr.bf16.gmra.mrb[0].mxu0 %v209
    %v297 = vpop.f32.mrb[0].mxu0
    %v298 = vadd.f32 %v97, %v297
    %v299 = vpop.f32.mrb[0].mxu0
    %v300 = vadd.f32 %v101, %v299
    %v301 = vpop.f32.mrb[0].mxu0
    %v302 = vadd.f32 %v97, %v301
    %v303 = vpop.f32.mrb[0].mxu0
    %v304 = vadd.f32 %v101, %v303
    %305 = vmatprep.mubr.bf16.mxu0 0
    %306 = vmatmul.mubr.bf16.gmra.mrb[0].mxu0 %v212
    %v307 = vpop.f32.mrb[0].mxu0
    %v308 = vadd.f32 %v97, %v307
    %v309 = vpop.f32.mrb[0].mxu0
    %v310 = vadd.f32 %v101, %v309
    %v311 = vpop.f32.mrb[0].mxu0
    %v312 = vadd.f32 %v97, %v311
    %v313 = vpop.f32.mrb[0].mxu0
    %v314 = vadd.f32 %v101, %v313
    %315 = vmatprep.mubr.bf16.mxu0 0
    %316 = vmatmul.mubr.bf16.gmra.mrb[0].mxu0 %v215
    %v317 = vpop.f32.mrb[0].mxu0
    %v318 = vadd.f32 %v97, %v317
    %v319 = vpop.f32.mrb[0].mxu0
    %v320 = vadd.f32 %v101, %v319
    %v321 = vpop.f32.mrb[0].mxu0
    %v322 = vadd.f32 %v97, %v321
    %v323 = vpop.f32.mrb[0].mxu0
    %v324 = vadd.f32 %v101, %v323
    %325 = vmatprep.mubr.bf16.mxu0 0
    %326 = vmatmul.mubr.bf16.gmra.mrb[0].mxu0 %v218
    %v327 = vpop.f32.mrb[0].mxu0
    %v328 = vadd.f32 %v97, %v327
    %v329 = vpop.f32.mrb[0].mxu0
    %v330 = vadd.f32 %v101, %v329
    %v331 = vpop.f32.mrb[0].mxu0
    %v332 = vadd.f32 %v97, %v331
    %v333 = vpop.f32.mrb[0].mxu0
    %v334 = vadd.f32 %v101, %v333
    %335 = vmatprep.mubr.bf16.mxu0 0
    %336 = vmatmul.mubr.bf16.gmra.mrb[0].mxu0 %v221
    %v337 = vpop.f32.mrb[0].mxu0
    %v338 = vadd.f32 %v97, %v337
    %v339 = vpop.f32.mrb[0].mxu0
    %v340 = vadd.f32 %v101, %v339
    %v341 = vpop.f32.mrb[0].mxu0
    %v342 = vadd.f32 %v97, %v341
    %v343 = vpop.f32.mrb[0].mxu0
    %v344 = vadd.f32 %v101, %v343
    %345 = vmatprep.mubr.bf16.mxu0 0
    %346 = vmatmul.mubr.bf16.gmra.mrb[0].mxu0 %v224
    %v347 = vpop.f32.mrb[0].mxu0
    %v348 = vadd.f32 %v97, %v347
    %v349 = vpop.f32.mrb[0].mxu0
    %v350 = vadd.f32 %v101, %v349
    %v351 = vpop.f32.mrb[0].mxu0
    %v352 = vadd.f32 %v97, %v351
    %v353 = vpop.f32.mrb[0].mxu0
    %v354 = vadd.f32 %v101, %v353
    %355 = vmatprep.mubr.bf16.mxu0 0
    %356 = vmatmul.mubr.bf16.gmra.mrb[0].mxu0 %v227
    %v357 = vpop.f32.mrb[0].mxu0
    %v358 = vadd.f32 %v97, %v357
    %v359 = vpop.f32.mrb[0].mxu0
    %v360 = vadd.f32 %v101, %v359
    %v361 = vpop.f32.mrb[0].mxu0
    %v362 = vadd.f32 %v97, %v361
    %v363 = vpop.f32.mrb[0].mxu0
    %v364 = vadd.f32 %v101, %v363
    %365 = vmatprep.mubr.bf16.mxu0 0
    %366 = vmatmul.mubr.bf16.gmra.mrb[0].mxu0 %v230
    %v367 = vpop.f32.mrb[0].mxu0
    %v368 = vadd.f32 %v97, %v367
    %v369 = vpop.f32.mrb[0].mxu0
    %v370 = vadd.f32 %v101, %v369
    %v371 = vpop.f32.mrb[0].mxu0
    %v372 = vadd.f32 %v97, %v371
    %v373 = vpop.f32.mrb[0].mxu0
    %v374 = vadd.f32 %v101, %v373
    %375 = vmatprep.mubr.bf16.mxu0 0
    %376 = vmatmul.mubr.bf16.gmra.mrb[0].mxu0 %v233
    %v377 = vpop.f32.mrb[0].mxu0
    %v378 = vadd.f32 %v97, %v377
    %v379 = vpop.f32.mrb[0].mxu0
    %v380 = vadd.f32 %v101, %v379
    %v381 = vpop.f32.mrb[0].mxu0
    %v382 = vadd.f32 %v97, %v381
    %v383 = vpop.f32.mrb[0].mxu0
    %v384 = vadd.f32 %v101, %v383
    %385 = vmatprep.mubr.bf16.mxu0 0
    %386 = vmatmul.mubr.bf16.gmra.mrb[0].mxu0 %v236
    %v387 = vpop.f32.mrb[0].mxu0
    %v388 = vadd.f32 %v97, %v387
    %v389 = vpop.f32.mrb[0].mxu0
    %v390 = vadd.f32 %v101, %v389
    %v391 = vpop.f32.mrb[0].mxu0
    %v392 = vadd.f32 %v97, %v391
    %v393 = vpop.f32.mrb[0].mxu0
    %v394 = vadd.f32 %v101, %v393
    %395 = vmatprep.mubr.bf16.mxu0 0
    %396 = vmatmul.mubr.bf16.gmra.mrb[0].mxu0 %v239
    %v397 = vpop.f32.mrb[0].mxu0
    %v398 = vadd.f32 %v97, %v397
    %v399 = vpop.f32.mrb[0].mxu0
    %v400 = vadd.f32 %v101, %v399
    %v401 = vpop.f32.mrb[0].mxu0
    %v402 = vadd.f32 %v97, %v401
    %v403 = vpop.f32.mrb[0].mxu0
    %v404 = vadd.f32 %v101, %v403
    %405 = vmatprep.mubr.bf16.mxu0 0
    %406 = vmatmul.mubr.bf16.gmra.mrb[0].mxu0 %v242
    %v407 = vpop.f32.mrb[0].mxu0
    %v408 = vadd.f32 %v97, %v407
    %v409 = vpop.f32.mrb[0].mxu0
    %v410 = vadd.f32 %v101, %v409
    %v411 = vpop.f32.mrb[0].mxu0
    %v412 = vadd.f32 %v97, %v411
    %v413 = vpop.f32.mrb[0].mxu0
    %v414 = vadd.f32 %v101, %v413
    %415 = vmatprep.mubr.bf16.mxu0 0
    %416 = vmatmul.mubr.bf16.gmra.mrb[0].mxu0 %v245
    %v417 = vpop.f32.mrb[0].mxu0
    %v418 = vadd.f32 %v97, %v417
    %v419 = vpop.f32.mrb[0].mxu0
    %v420 = vadd.f32 %v101, %v419
    %v421 = vpop.f32.mrb[0].mxu0
    %v422 = vadd.f32 %v97, %v421
    %v423 = vpop.f32.mrb[0].mxu0
    %v424 = vadd.f32 %v101, %v423
    %425 = vmatprep.mubr.bf16.mxu0 0
    %426 = vmatmul.mubr.bf16.gmra.mrb[0].mxu0 %v248
    %v427 = vpop.f32.mrb[0].mxu0
    %v428 = vadd.f32 %v97, %v427
    %v429 = vpop.f32.mrb[0].mxu0
    %v430 = vadd.f32 %v101, %v429
    %v431 = vpop.f32.mrb[0].mxu0
    %v432 = vadd.f32 %v97, %v431
    %v433 = vpop.f32.mrb[0].mxu0
    %v434 = vadd.f32 %v101, %v433
    %435 = vmatprep.mubr.bf16.mxu0 0
    %436 = vmatmul.mubr.bf16.gmra.mrb[0].mxu0 %v251
    %v437 = vpop.f32.mrb[0].mxu0
    %v438 = vadd.f32 %v97, %v437
    %v439 = vpop.f32.mrb[0].mxu0
    %v440 = vadd.f32 %v101, %v439
    %v441 = vpop.f32.mrb[0].mxu0
    %v442 = vadd.f32 %v97, %v441
    %v443 = vpop.f32.mrb[0].mxu0
    %v444 = vadd.f32 %v101, %v443
    %445 = vdwg.mxu0
    %v446 = vmax.f32 %v288, 0.0
    %v447 = vmax.f32 %v290, 0.0
    %v448 = vmax.f32 %v292, 0.0
    %v449 = vmax.f32 %v294, 0.0
    %v450 = vmax.f32 %v298, 0.0
    %v451 = vmax.f32 %v300, 0.0
    %v452 = vmax.f32 %v302, 0.0
    %v453 = vmax.f32 %v304, 0.0
    %v454 = vmax.f32 %v308, 0.0
    %v455 = vmax.f32 %v310, 0.0
    %v456 = vmax.f32 %v312, 0.0
    %v457 = vmax.f32 %v314, 0.0
    %v458 = vmax.f32 %v318, 0.0
    %v459 = vmax.f32 %v320, 0.0
    %v460 = vmax.f32 %v322, 0.0
    %v461 = vmax.f32 %v324, 0.0
    %v462 = vmax.f32 %v328, 0.0
    %v463 = vmax.f32 %v330, 0.0
    %v464 = vmax.f32 %v332, 0.0
    %v465 = vmax.f32 %v334, 0.0
    %v466 = vmax.f32 %v338, 0.0
    %v467 = vmax.f32 %v340, 0.0
    %v468 = vmax.f32 %v342, 0.0
    %v469 = vmax.f32 %v344, 0.0
    %v470 = vmax.f32 %v348, 0.0
    %v471 = vmax.f32 %v350, 0.0
    %v472 = vmax.f32 %v352, 0.0
    %v473 = vmax.f32 %v354, 0.0
    %v474 = vmax.f32 %v358, 0.0
    %v475 = vmax.f32 %v360, 0.0
    %v476 = vmax.f32 %v362, 0.0
    %v477 = vmax.f32 %v364, 0.0
    %v478 = vmax.f32 %v368, 0.0
    %v479 = vmax.f32 %v370, 0.0
    %v480 = vmax.f32 %v372, 0.0
    %v481 = vmax.f32 %v374, 0.0
    %v482 = vmax.f32 %v378, 0.0
    %v483 = vmax.f32 %v380, 0.0
    %v484 = vmax.f32 %v382, 0.0
    %v485 = vmax.f32 %v384, 0.0
    %v486 = vmax.f32 %v388, 0.0
    %v487 = vmax.f32 %v390, 0.0
    %v488 = vmax.f32 %v392, 0.0
    %v489 = vmax.f32 %v394, 0.0
    %v490 = vmax.f32 %v398, 0.0
    %v491 = vmax.f32 %v400, 0.0
    %v492 = vmax.f32 %v402, 0.0
    %v493 = vmax.f32 %v404, 0.0
    %v494 = vmax.f32 %v408, 0.0
    %v495 = vmax.f32 %v410, 0.0
    %v496 = vmax.f32 %v412, 0.0
    %v497 = vmax.f32 %v414, 0.0
    %v498 = vmax.f32 %v418, 0.0
    %v499 = vmax.f32 %v420, 0.0
    %v500 = vmax.f32 %v422, 0.0
    %v501 = vmax.f32 %v424, 0.0
    %v502 = vmax.f32 %v428, 0.0
    %v503 = vmax.f32 %v430, 0.0
    %v504 = vmax.f32 %v432, 0.0
    %v505 = vmax.f32 %v434, 0.0
    %v506 = vmax.f32 %v438, 0.0
    %v507 = vmax.f32 %v440, 0.0
    %v508 = vmax.f32 %v442, 0.0
    %v509 = vmax.f32 %v444, 0.0
    %v510 = vpack.c.bf16 %v448, %v446
    %v511 = vpack.c.bf16 %v449, %v447
    %v512 = vpack.c.bf16 %v452, %v450
    %v513 = vpack.c.bf16 %v453, %v451
    %v514 = vpack.c.bf16 %v456, %v454
    %v515 = vpack.c.bf16 %v457, %v455
    %v516 = vpack.c.bf16 %v460, %v458
    %v517 = vpack.c.bf16 %v461, %v459
    %v518 = vpack.c.bf16 %v464, %v462
    %v519 = vpack.c.bf16 %v465, %v463
    %v520 = vpack.c.bf16 %v468, %v466
    %v521 = vpack.c.bf16 %v469, %v467
    %v522 = vpack.c.bf16 %v472, %v470
    %v523 = vpack.c.bf16 %v473, %v471
    %v524 = vpack.c.bf16 %v476, %v474
    %v525 = vpack.c.bf16 %v477, %v475
    %v526 = vpack.c.bf16 %v480, %v478
    %v527 = vpack.c.bf16 %v481, %v479
    %v528 = vpack.c.bf16 %v484, %v482
    %v529 = vpack.c.bf16 %v485, %v483
    %v530 = vpack.c.bf16 %v488, %v486
    %v531 = vpack.c.bf16 %v489, %v487
    %v532 = vpack.c.bf16 %v492, %v490
    %v533 = vpack.c.bf16 %v493, %v491
    %v534 = vpack.c.bf16 %v496, %v494
    %v535 = vpack.c.bf16 %v497, %v495
    %v536 = vpack.c.bf16 %v500, %v498
    %v537 = vpack.c.bf16 %v501, %v499
    %v538 = vpack.c.bf16 %v504, %v502
    %v539 = vpack.c.bf16 %v505, %v503
    %v540 = vpack.c.bf16 %v508, %v506
    %v541 = vpack.c.bf16 %v509, %v507
    %v542 = vld [vmem:[#allocation2] sm:$0xff]
    %v543 = vld [vmem:[#allocation2 + $0x8] sm:$0xff]
    %v544 = vld [vmem:[#allocation2 + $0x10] sm:$0xff]
    %v545 = vld [vmem:[#allocation2 + $0x18] sm:$0xff]
    %v546 = vld [vmem:[#allocation2 + $0x20] sm:$0xff]
    %v547 = vld [vmem:[#allocation2 + $0x28] sm:$0xff]
    %v548 = vld [vmem:[#allocation2 + $0x30] sm:$0xff]
    %v549 = vld [vmem:[#allocation2 + $0x38] sm:$0xff]
    %v550 = vld [vmem:[#allocation2 + $0x40] sm:$0xff]
    %v551 = vld [vmem:[#allocation2 + $0x48] sm:$0xff]
    %v552 = vld [vmem:[#allocation2 + $0x50] sm:$0xff]
    %v553 = vld [vmem:[#allocation2 + $0x58] sm:$0xff]
    %v554 = vld [vmem:[#allocation2 + $0x60] sm:$0xff]
    %v555 = vld [vmem:[#allocation2 + $0x68] sm:$0xff]
    %v556 = vld [vmem:[#allocation2 + $0x70] sm:$0xff]
    %v557 = vld [vmem:[#allocation2 + $0x78] sm:$0xff]
    %v558 = vld [vmem:[#allocation2 + $0x80] sm:$0xff]
    %v559 = vld [vmem:[#allocation2 + $0x88] sm:$0xff]
    %v560 = vld [vmem:[#allocation2 + $0x90] sm:$0xff]
    %v561 = vld [vmem:[#allocation2 + $0x98] sm:$0xff]
    %v562 = vld [vmem:[#allocation2 + $0xa0] sm:$0xff]
    %v563 = vld [vmem:[#allocation2 + $0xa8] sm:$0xff]
    %v564 = vld [vmem:[#allocation2 + $0xb0] sm:$0xff]
    %v565 = vld [vmem:[#allocation2 + $0xb8] sm:$0xff]
    %v566 = vld [vmem:[#allocation2 + $0xc0] sm:$0xff]
    %v567 = vld [vmem:[#allocation2 + $0xc8] sm:$0xff]
    %v568 = vld [vmem:[#allocation2 + $0xd0] sm:$0xff]
    %v569 = vld [vmem:[#allocation2 + $0xd8] sm:$0xff]
    %v570 = vld [vmem:[#allocation2 + $0xe0] sm:$0xff]
    %v571 = vld [vmem:[#allocation2 + $0xe8] sm:$0xff]
    %v572 = vld [vmem:[#allocation2 + $0xf0] sm:$0xff]
    %v573 = vld [vmem:[#allocation2 + $0xf8] sm:$0xff]
    %v574 = vld [vmem:[#allocation2 + $0x100] sm:$0xff]
    %v575 = vld [vmem:[#allocation2 + $0x108] sm:$0xff]
    %v576 = vld [vmem:[#allocation2 + $0x110] sm:$0xff]
    %v577 = vld [vmem:[#allocation2 + $0x118] sm:$0xff]
    %v578 = vld [vmem:[#allocation2 + $0x120] sm:$0xff]
    %v579 = vld [vmem:[#allocation2 + $0x128] sm:$0xff]
    %v580 = vld [vmem:[#allocation2 + $0x130] sm:$0xff]
    %v581 = vld [vmem:[#allocation2 + $0x138] sm:$0xff]
    %v582 = vld [vmem:[#allocation2 + $0x140] sm:$0xff]
    %v583 = vld [vmem:[#allocation2 + $0x148] sm:$0xff]
    %v584 = vld [vmem:[#allocation2 + $0x150] sm:$0xff]
    %v585 = vld [vmem:[#allocation2 + $0x158] sm:$0xff]
    %v586 = vld [vmem:[#allocation2 + $0x160] sm:$0xff]
    %v587 = vld [vmem:[#allocation2 + $0x168] sm:$0xff]
    %v588 = vld [vmem:[#allocation2 + $0x170] sm:$0xff]
    %v589 = vld [vmem:[#allocation2 + $0x178] sm:$0xff]
    %v590 = vld [vmem:[#allocation2 + $0x180] sm:$0xff]
    %v591 = vld [vmem:[#allocation2 + $0x188] sm:$0xff]
    %v592 = vld [vmem:[#allocation2 + $0x190] sm:$0xff]
    %v593 = vld [vmem:[#allocation2 + $0x198] sm:$0xff]
    %v594 = vld [vmem:[#allocation2 + $0x1a0] sm:$0xff]
    %v595 = vld [vmem:[#allocation2 + $0x1a8] sm:$0xff]
    %v596 = vld [vmem:[#allocation2 + $0x1b0] sm:$0xff]
    %v597 = vld [vmem:[#allocation2 + $0x1b8] sm:$0xff]
    %v598 = vld [vmem:[#allocation2 + $0x1c0] sm:$0xff]
    %v599 = vld [vmem:[#allocation2 + $0x1c8] sm:$0xff]
    %v600 = vld [vmem:[#allocation2 + $0x1d0] sm:$0xff]
    %v601 = vld [vmem:[#allocation2 + $0x1d8] sm:$0xff]
    %v602 = vld [vmem:[#allocation2 + $0x1e0] sm:$0xff]
    %v603 = vld [vmem:[#allocation2 + $0x1e8] sm:$0xff]
    %v604 = vld [vmem:[#allocation2 + $0x1f0] sm:$0xff]
    %v605 = vld [vmem:[#allocation2 + $0x1f8] sm:$0xff]
    %v606 = vld [vmem:[%s4] sm:$0xf]
    %v608 = vlaneseq
    %v609 = vshrl.u32 %v608, 7
    %v610 = vsub.s32 0, %v609
    %v611 = vrot.slane %v606, %v610
    %v612 = vlaneseq
    %v613 = vshrl.u32 %v612, 7
    %v614 = vsub.s32 1, %v613
    %v615 = vrot.slane %v606, %v614
    %v616 = vlaneseq
    %v617 = vshrl.u32 %v616, 7
    %v618 = vsub.s32 2, %v617
    %v619 = vrot.slane %v606, %v618
    %v620 = vlaneseq
    %v621 = vshrl.u32 %v620, 7
    %v622 = vsub.s32 3, %v621
    %v623 = vrot.slane %v606, %v622
    %v692 = vunpack.c.l.b16 %v542
    %v693 = vunpack.c.h.b16 %v542
    %v694 = vunpack.c.l.b16 %v543
    %v695 = vunpack.c.h.b16 %v543
    %v696 = vunpack.c.l.b16 %v544
    %v697 = vunpack.c.h.b16 %v544
    %v698 = vunpack.c.l.b16 %v545
    %v699 = vunpack.c.h.b16 %v545
    %v700 = vunpack.c.l.b16 %v546
    %v701 = vunpack.c.h.b16 %v546
    %v702 = vunpack.c.l.b16 %v547
    %v703 = vunpack.c.h.b16 %v547
    %v704 = vunpack.c.l.b16 %v548
    %v705 = vunpack.c.h.b16 %v548
    %v706 = vunpack.c.l.b16 %v549
    %v707 = vunpack.c.h.b16 %v549
    %v708 = vunpack.c.l.b16 %v550
    %v709 = vunpack.c.h.b16 %v550
    %v710 = vunpack.c.l.b16 %v551
    %v711 = vunpack.c.h.b16 %v551
    %v712 = vunpack.c.l.b16 %v552
    %v713 = vunpack.c.h.b16 %v552
    %v714 = vunpack.c.l.b16 %v553
    %v715 = vunpack.c.h.b16 %v553
    %v716 = vunpack.c.l.b16 %v554
    %v717 = vunpack.c.h.b16 %v554
    %v718 = vunpack.c.l.b16 %v555
    %v719 = vunpack.c.h.b16 %v555
    %v720 = vunpack.c.l.b16 %v556
    %v721 = vunpack.c.h.b16 %v556
    %v722 = vunpack.c.l.b16 %v557
    %v723 = vunpack.c.h.b16 %v557
    %v724 = vunpack.c.l.b16 %v558
    %v725 = vunpack.c.h.b16 %v558
    %v726 = vunpack.c.l.b16 %v559
    %v727 = vunpack.c.h.b16 %v559
    %v728 = vunpack.c.l.b16 %v560
    %v729 = vunpack.c.h.b16 %v560
    %v730 = vunpack.c.l.b16 %v561
    %v731 = vunpack.c.h.b16 %v561
    %v732 = vunpack.c.l.b16 %v562
    %v733 = vunpack.c.h.b16 %v562
    %v734 = vunpack.c.l.b16 %v563
    %v735 = vunpack.c.h.b16 %v563
    %v736 = vunpack.c.l.b16 %v564
    %v737 = vunpack.c.h.b16 %v564
    %v738 = vunpack.c.l.b16 %v565
    %v739 = vunpack.c.h.b16 %v565
    %v740 = vunpack.c.l.b16 %v566
    %v741 = vunpack.c.h.b16 %v566
    %v742 = vunpack.c.l.b16 %v567
    %v743 = vunpack.c.h.b16 %v567
    %v744 = vunpack.c.l.b16 %v568
    %v745 = vunpack.c.h.b16 %v568
    %v746 = vunpack.c.l.b16 %v569
    %v747 = vunpack.c.h.b16 %v569
    %v748 = vunpack.c.l.b16 %v570
    %v749 = vunpack.c.h.b16 %v570
    %v750 = vunpack.c.l.b16 %v571
    %v751 = vunpack.c.h.b16 %v571
    %v752 = vunpack.c.l.b16 %v572
    %v753 = vunpack.c.h.b16 %v572
    %v754 = vunpack.c.l.b16 %v573
    %v755 = vunpack.c.h.b16 %v573
    %v756 = vunpack.c.l.b16 %v574
    %v757 = vunpack.c.h.b16 %v574
    %v758 = vunpack.c.l.b16 %v575
    %v759 = vunpack.c.h.b16 %v575
    %v760 = vunpack.c.l.b16 %v576
    %v761 = vunpack.c.h.b16 %v576
    %v762 = vunpack.c.l.b16 %v577
    %v763 = vunpack.c.h.b16 %v577
    %v764 = vunpack.c.l.b16 %v578
    %v765 = vunpack.c.h.b16 %v578
    %v766 = vunpack.c.l.b16 %v579
    %v767 = vunpack.c.h.b16 %v579
    %v768 = vunpack.c.l.b16 %v580
    %v769 = vunpack.c.h.b16 %v580
    %v770 = vunpack.c.l.b16 %v581
    %v771 = vunpack.c.h.b16 %v581
    %v772 = vunpack.c.l.b16 %v582
    %v773 = vunpack.c.h.b16 %v582
    %v774 = vunpack.c.l.b16 %v583
    %v775 = vunpack.c.h.b16 %v583
    %v776 = vunpack.c.l.b16 %v584
    %v777 = vunpack.c.h.b16 %v584
    %v778 = vunpack.c.l.b16 %v585
    %v779 = vunpack.c.h.b16 %v585
    %v780 = vunpack.c.l.b16 %v586
    %v781 = vunpack.c.h.b16 %v586
    %v782 = vunpack.c.l.b16 %v587
    %v783 = vunpack.c.h.b16 %v587
    %v784 = vunpack.c.l.b16 %v588
    %v785 = vunpack.c.h.b16 %v588
    %v786 = vunpack.c.l.b16 %v589
    %v787 = vunpack.c.h.b16 %v589
    %v788 = vunpack.c.l.b16 %v590
    %v789 = vunpack.c.h.b16 %v590
    %v790 = vunpack.c.l.b16 %v591
    %v791 = vunpack.c.h.b16 %v591
    %v792 = vunpack.c.l.b16 %v592
    %v793 = vunpack.c.h.b16 %v592
    %v794 = vunpack.c.l.b16 %v593
    %v795 = vunpack.c.h.b16 %v593
    %v796 = vunpack.c.l.b16 %v594
    %v797 = vunpack.c.h.b16 %v594
    %v798 = vunpack.c.l.b16 %v595
    %v799 = vunpack.c.h.b16 %v595
    %v800 = vunpack.c.l.b16 %v596
    %v801 = vunpack.c.h.b16 %v596
    %v802 = vunpack.c.l.b16 %v597
    %v803 = vunpack.c.h.b16 %v597
    %v804 = vunpack.c.l.b16 %v598
    %v805 = vunpack.c.h.b16 %v598
    %v806 = vunpack.c.l.b16 %v599
    %v807 = vunpack.c.h.b16 %v599
    %v808 = vunpack.c.l.b16 %v600
    %v809 = vunpack.c.h.b16 %v600
    %v810 = vunpack.c.l.b16 %v601
    %v811 = vunpack.c.h.b16 %v601
    %v812 = vunpack.c.l.b16 %v602
    %v813 = vunpack.c.h.b16 %v602
    %v814 = vunpack.c.l.b16 %v603
    %v815 = vunpack.c.h.b16 %v603
    %v816 = vunpack.c.l.b16 %v604
    %v817 = vunpack.c.h.b16 %v604
    %v818 = vunpack.c.l.b16 %v605
    %v819 = vunpack.c.h.b16 %v605
    %v820 = vpack.c.b16 %v696, %v692
    %v821 = vpack.c.b16 %v697, %v693
    %v822 = vpack.c.b16 %v698, %v694
    %v823 = vpack.c.b16 %v699, %v695
    %v824 = vpack.c.b16 %v704, %v700
    %v825 = vpack.c.b16 %v705, %v701
    %v826 = vpack.c.b16 %v706, %v702
    %v827 = vpack.c.b16 %v707, %v703
    %v828 = vpack.c.b16 %v712, %v708
    %v829 = vpack.c.b16 %v713, %v709
    %v830 = vpack.c.b16 %v714, %v710
    %v831 = vpack.c.b16 %v715, %v711
    %v832 = vpack.c.b16 %v720, %v716
    %v833 = vpack.c.b16 %v721, %v717
    %v834 = vpack.c.b16 %v722, %v718
    %v835 = vpack.c.b16 %v723, %v719
    %v836 = vpack.c.b16 %v728, %v724
    %v837 = vpack.c.b16 %v729, %v725
    %v838 = vpack.c.b16 %v730, %v726
    %v839 = vpack.c.b16 %v731, %v727
    %v840 = vpack.c.b16 %v736, %v732
    %v841 = vpack.c.b16 %v737, %v733
    %v842 = vpack.c.b16 %v738, %v734
    %v843 = vpack.c.b16 %v739, %v735
    %v844 = vpack.c.b16 %v744, %v740
    %v845 = vpack.c.b16 %v745, %v741
    %v846 = vpack.c.b16 %v746, %v742
    %v847 = vpack.c.b16 %v747, %v743
    %v848 = vpack.c.b16 %v752, %v748
    %v849 = vpack.c.b16 %v753, %v749
    %v850 = vpack.c.b16 %v754, %v750
    %v851 = vpack.c.b16 %v755, %v751
    %v852 = vpack.c.b16 %v760, %v756
    %v853 = vpack.c.b16 %v761, %v757
    %v854 = vpack.c.b16 %v762, %v758
    %v855 = vpack.c.b16 %v763, %v759
    %v856 = vpack.c.b16 %v768, %v764
    %v857 = vpack.c.b16 %v769, %v765
    %v858 = vpack.c.b16 %v770, %v766
    %v859 = vpack.c.b16 %v771, %v767
    %v860 = vpack.c.b16 %v776, %v772
    %v861 = vpack.c.b16 %v777, %v773
    %v862 = vpack.c.b16 %v778, %v774
    %v863 = vpack.c.b16 %v779, %v775
    %v864 = vpack.c.b16 %v784, %v780
    %v865 = vpack.c.b16 %v785, %v781
    %v866 = vpack.c.b16 %v786, %v782
    %v867 = vpack.c.b16 %v787, %v783
    %v868 = vpack.c.b16 %v792, %v788
    %v869 = vpack.c.b16 %v793, %v789
    %v870 = vpack.c.b16 %v794, %v790
    %v871 = vpack.c.b16 %v795, %v791
    %v872 = vpack.c.b16 %v800, %v796
    %v873 = vpack.c.b16 %v801, %v797
    %v874 = vpack.c.b16 %v802, %v798
    %v875 = vpack.c.b16 %v803, %v799
    %v876 = vpack.c.b16 %v808, %v804
    %v877 = vpack.c.b16 %v809, %v805
    %v878 = vpack.c.b16 %v810, %v806
    %v879 = vpack.c.b16 %v811, %v807
    %v880 = vpack.c.b16 %v816, %v812
    %v881 = vpack.c.b16 %v817, %v813
    %v882 = vpack.c.b16 %v818, %v814
    %v883 = vpack.c.b16 %v819, %v815
    %948 = vmatprep.subr.bf16.mxu0 %v821
    %949 = vmatpush1.bf16.msra.mxu0 %v820
    %950 = vmatprep.subr.bf16.mxu0 %v825
    %951 = vmatpush1.bf16.msra.mxu0 %v824
    %952 = vmatprep.subr.bf16.mxu0 %v829
    %953 = vmatpush1.bf16.msra.mxu0 %v828
    %954 = vmatprep.subr.bf16.mxu0 %v833
    %955 = vmatpush1.bf16.msra.mxu0 %v832
    %956 = vmatprep.subr.bf16.mxu0 %v837
    %957 = vmatpush1.bf16.msra.mxu0 %v836
    %958 = vmatprep.subr.bf16.mxu0 %v841
    %959 = vmatpush1.bf16.msra.mxu0 %v840
    %960 = vmatprep.subr.bf16.mxu0 %v845
    %961 = vmatpush1.bf16.msra.mxu0 %v844
    %962 = vmatprep.subr.bf16.mxu0 %v849
    %963 = vmatpush1.bf16.msra.mxu0 %v848
    %964 = vmatprep.subr.bf16.mxu0 %v853
    %965 = vmatpush1.bf16.msra.mxu0 %v852
    %966 = vmatprep.subr.bf16.mxu0 %v857
    %967 = vmatpush1.bf16.msra.mxu0 %v856
    %968 = vmatprep.subr.bf16.mxu0 %v861
    %969 = vmatpush1.bf16.msra.mxu0 %v860
    %970 = vmatprep.subr.bf16.mxu0 %v865
    %971 = vmatpush1.bf16.msra.mxu0 %v864
    %972 = vmatprep.subr.bf16.mxu0 %v869
    %973 = vmatpush1.bf16.msra.mxu0 %v868
    %974 = vmatprep.subr.bf16.mxu0 %v873
    %975 = vmatpush1.bf16.msra.mxu0 %v872
    %976 = vmatprep.subr.bf16.mxu0 %v877
    %977 = vmatpush1.bf16.msra.mxu0 %v876
    %978 = vmatprep.subr.bf16.mxu0 %v881
    %979 = vmatpush1.bf16.msra.mxu0 %v880
    %980 = vmatprep.mubr.bf16.mxu0 %v511
    %981 = vmatmul.mubr.bf16.gmra.mrb[0].mxu0 %v510
    %v982 = vpop.f32.mrb[0].mxu0
    %v983 = vadd.f32 %v611, %v982
    %v984 = vpop.f32.mrb[0].mxu0
    %v985 = vadd.f32 %v615, %v984
    %v986 = vpop.f32.mrb[0].mxu0
    %v987 = vadd.f32 %v611, %v986
    %v988 = vpop.f32.mrb[0].mxu0
    %v989 = vadd.f32 %v615, %v988
    %990 = vmatprep.mubr.bf16.mxu0 %v513
    %991 = vmatmul.mubr.bf16.gmra.mrb[0].mxu0 %v512
    %v992 = vpop.f32.mrb[0].mxu0
    %v993 = vadd.f32 %v611, %v992
    %v994 = vpop.f32.mrb[0].mxu0
    %v995 = vadd.f32 %v615, %v994
    %v996 = vpop.f32.mrb[0].mxu0
    %v997 = vadd.f32 %v611, %v996
    %v998 = vpop.f32.mrb[0].mxu0
    %v999 = vadd.f32 %v615, %v998
    %1000 = vmatprep.mubr.bf16.mxu0 %v515
    %1001 = vmatmul.mubr.bf16.gmra.mrb[0].mxu0 %v514
    %v1002 = vpop.f32.mrb[0].mxu0
    %v1003 = vadd.f32 %v611, %v1002
    %v1004 = vpop.f32.mrb[0].mxu0
    %v1005 = vadd.f32 %v615, %v1004
    %v1006 = vpop.f32.mrb[0].mxu0
    %v1007 = vadd.f32 %v611, %v1006
    %v1008 = vpop.f32.mrb[0].mxu0
    %v1009 = vadd.f32 %v615, %v1008
    %1010 = vmatprep.mubr.bf16.mxu0 %v517
    %1011 = vmatmul.mubr.bf16.gmra.mrb[0].mxu0 %v516
    %v1012 = vpop.f32.mrb[0].mxu0
    %v1013 = vadd.f32 %v611, %v1012
    %v1014 = vpop.f32.mrb[0].mxu0
    %v1015 = vadd.f32 %v615, %v1014
    %v1016 = vpop.f32.mrb[0].mxu0
    %v1017 = vadd.f32 %v611, %v1016
    %v1018 = vpop.f32.mrb[0].mxu0
    %v1019 = vadd.f32 %v615, %v1018
    %1020 = vmatprep.mubr.bf16.mxu0 %v519
    %1021 = vmatmul.mubr.bf16.gmra.mrb[0].mxu0 %v518
    %v1022 = vpop.f32.mrb[0].mxu0
    %v1023 = vadd.f32 %v611, %v1022
    %v1024 = vpop.f32.mrb[0].mxu0
    %v1025 = vadd.f32 %v615, %v1024
    %v1026 = vpop.f32.mrb[0].mxu0
    %v1027 = vadd.f32 %v611, %v1026
    %v1028 = vpop.f32.mrb[0].mxu0
    %v1029 = vadd.f32 %v615, %v1028
    %1030 = vmatprep.mubr.bf16.mxu0 %v521
    %1031 = vmatmul.mubr.bf16.gmra.mrb[0].mxu0 %v520
    %v1032 = vpop.f32.mrb[0].mxu0
    %v1033 = vadd.f32 %v611, %v1032
    %v1034 = vpop.f32.mrb[0].mxu0
    %v1035 = vadd.f32 %v615, %v1034
    %v1036 = vpop.f32.mrb[0].mxu0
    %v1037 = vadd.f32 %v611, %v1036
    %v1038 = vpop.f32.mrb[0].mxu0
    %v1039 = vadd.f32 %v615, %v1038
    %1040 = vmatprep.mubr.bf16.mxu0 %v523
    %1041 = vmatmul.mubr.bf16.gmra.mrb[0].mxu0 %v522
    %v1042 = vpop.f32.mrb[0].mxu0
    %v1043 = vadd.f32 %v611, %v1042
    %v1044 = vpop.f32.mrb[0].mxu0
    %v1045 = vadd.f32 %v615, %v1044
    %v1046 = vpop.f32.mrb[0].mxu0
    %v1047 = vadd.f32 %v611, %v1046
    %v1048 = vpop.f32.mrb[0].mxu0
    %v1049 = vadd.f32 %v615, %v1048
    %1050 = vmatprep.mubr.bf16.mxu0 %v525
    %1051 = vmatmul.mubr.bf16.gmra.mrb[0].mxu0 %v524
    %v1052 = vpop.f32.mrb[0].mxu0
    %v1053 = vadd.f32 %v611, %v1052
    %v1054 = vpop.f32.mrb[0].mxu0
    %v1055 = vadd.f32 %v615, %v1054
    %v1056 = vpop.f32.mrb[0].mxu0
    %v1057 = vadd.f32 %v611, %v1056
    %v1058 = vpop.f32.mrb[0].mxu0
    %v1059 = vadd.f32 %v615, %v1058
    %1060 = vmatprep.mubr.bf16.mxu0 %v527
    %1061 = vmatmul.mubr.bf16.gmra.mrb[0].mxu0 %v526
    %v1062 = vpop.f32.mrb[0].mxu0
    %v1063 = vadd.f32 %v611, %v1062
    %v1064 = vpop.f32.mrb[0].mxu0
    %v1065 = vadd.f32 %v615, %v1064
    %v1066 = vpop.f32.mrb[0].mxu0
    %v1067 = vadd.f32 %v611, %v1066
    %v1068 = vpop.f32.mrb[0].mxu0
    %v1069 = vadd.f32 %v615, %v1068
    %1070 = vmatprep.mubr.bf16.mxu0 %v529
    %1071 = vmatmul.mubr.bf16.gmra.mrb[0].mxu0 %v528
    %v1072 = vpop.f32.mrb[0].mxu0
    %v1073 = vadd.f32 %v611, %v1072
    %v1074 = vpop.f32.mrb[0].mxu0
    %v1075 = vadd.f32 %v615, %v1074
    %v1076 = vpop.f32.mrb[0].mxu0
    %v1077 = vadd.f32 %v611, %v1076
    %v1078 = vpop.f32.mrb[0].mxu0
    %v1079 = vadd.f32 %v615, %v1078
    %1080 = vmatprep.mubr.bf16.mxu0 %v531
    %1081 = vmatmul.mubr.bf16.gmra.mrb[0].mxu0 %v530
    %v1082 = vpop.f32.mrb[0].mxu0
    %v1083 = vadd.f32 %v611, %v1082
    %v1084 = vpop.f32.mrb[0].mxu0
    %v1085 = vadd.f32 %v615, %v1084
    %v1086 = vpop.f32.mrb[0].mxu0
    %v1087 = vadd.f32 %v611, %v1086
    %v1088 = vpop.f32.mrb[0].mxu0
    %v1089 = vadd.f32 %v615, %v1088
    %1090 = vmatprep.mubr.bf16.mxu0 %v533
    %1091 = vmatmul.mubr.bf16.gmra.mrb[0].mxu0 %v532
    %v1092 = vpop.f32.mrb[0].mxu0
    %v1093 = vadd.f32 %v611, %v1092
    %v1094 = vpop.f32.mrb[0].mxu0
    %v1095 = vadd.f32 %v615, %v1094
    %v1096 = vpop.f32.mrb[0].mxu0
    %v1097 = vadd.f32 %v611, %v1096
    %v1098 = vpop.f32.mrb[0].mxu0
    %v1099 = vadd.f32 %v615, %v1098
    %1100 = vmatprep.mubr.bf16.mxu0 %v535
    %1101 = vmatmul.mubr.bf16.gmra.mrb[0].mxu0 %v534
    %v1102 = vpop.f32.mrb[0].mxu0
    %v1103 = vadd.f32 %v611, %v1102
    %v1104 = vpop.f32.mrb[0].mxu0
    %v1105 = vadd.f32 %v615, %v1104
    %v1106 = vpop.f32.mrb[0].mxu0
    %v1107 = vadd.f32 %v611, %v1106
    %v1108 = vpop.f32.mrb[0].mxu0
    %v1109 = vadd.f32 %v615, %v1108
    %1110 = vmatprep.mubr.bf16.mxu0 %v537
    %1111 = vmatmul.mubr.bf16.gmra.mrb[0].mxu0 %v536
    %v1112 = vpop.f32.mrb[0].mxu0
    %v1113 = vadd.f32 %v611, %v1112
    %v1114 = vpop.f32.mrb[0].mxu0
    %v1115 = vadd.f32 %v615, %v1114
    %v1116 = vpop.f32.mrb[0].mxu0
    %v1117 = vadd.f32 %v611, %v1116
    %v1118 = vpop.f32.mrb[0].mxu0
    %v1119 = vadd.f32 %v615, %v1118
    %1120 = vmatprep.mubr.bf16.mxu0 %v539
    %1121 = vmatmul.mubr.bf16.gmra.mrb[0].mxu0 %v538
    %v1122 = vpop.f32.mrb[0].mxu0
    %v1123 = vadd.f32 %v611, %v1122
    %v1124 = vpop.f32.mrb[0].mxu0
    %v1125 = vadd.f32 %v615, %v1124
    %v1126 = vpop.f32.mrb[0].mxu0
    %v1127 = vadd.f32 %v611, %v1126
    %v1128 = vpop.f32.mrb[0].mxu0
    %v1129 = vadd.f32 %v615, %v1128
    %1130 = vmatprep.mubr.bf16.mxu0 %v541
    %1131 = vmatmul.mubr.bf16.gmra.mrb[0].mxu0 %v540
    %v1132 = vpop.f32.mrb[0].mxu0
    %v1133 = vadd.f32 %v611, %v1132
    %v1134 = vpop.f32.mrb[0].mxu0
    %v1135 = vadd.f32 %v615, %v1134
    %v1136 = vpop.f32.mrb[0].mxu0
    %v1137 = vadd.f32 %v611, %v1136
    %v1138 = vpop.f32.mrb[0].mxu0
    %v1139 = vadd.f32 %v615, %v1138
    %1140 = vdwg.mxu0
    %1141 = vmatprep.subr.bf16.mxu0 %v823
    %1142 = vmatpush1.bf16.msra.mxu0 %v822
    %1143 = vmatprep.subr.bf16.mxu0 %v827
    %1144 = vmatpush1.bf16.msra.mxu0 %v826
    %1145 = vmatprep.subr.bf16.mxu0 %v831
    %1146 = vmatpush1.bf16.msra.mxu0 %v830
    %1147 = vmatprep.subr.bf16.mxu0 %v835
    %1148 = vmatpush1.bf16.msra.mxu0 %v834
    %1149 = vmatprep.subr.bf16.mxu0 %v839
    %1150 = vmatpush1.bf16.msra.mxu0 %v838
    %1151 = vmatprep.subr.bf16.mxu0 %v843
    %1152 = vmatpush1.bf16.msra.mxu0 %v842
    %1153 = vmatprep.subr.bf16.mxu0 %v847
    %1154 = vmatpush1.bf16.msra.mxu0 %v846
    %1155 = vmatprep.subr.bf16.mxu0 %v851
    %1156 = vmatpush1.bf16.msra.mxu0 %v850
    %1157 = vmatprep.subr.bf16.mxu0 %v855
    %1158 = vmatpush1.bf16.msra.mxu0 %v854
    %1159 = vmatprep.subr.bf16.mxu0 %v859
    %1160 = vmatpush1.bf16.msra.mxu0 %v858
    %1161 = vmatprep.subr.bf16.mxu0 %v863
    %1162 = vmatpush1.bf16.msra.mxu0 %v862
    %1163 = vmatprep.subr.bf16.mxu0 %v867
    %1164 = vmatpush1.bf16.msra.mxu0 %v866
    %1165 = vmatprep.subr.bf16.mxu0 %v871
    %1166 = vmatpush1.bf16.msra.mxu0 %v870
    %1167 = vmatprep.subr.bf16.mxu0 %v875
    %1168 = vmatpush1.bf16.msra.mxu0 %v874
    %1169 = vmatprep.subr.bf16.mxu0 %v879
    %1170 = vmatpush1.bf16.msra.mxu0 %v878
    %1171 = vmatprep.subr.bf16.mxu0 %v883
    %1172 = vmatpush1.bf16.msra.mxu0 %v882
    %1173 = vmatprep.mubr.bf16.mxu0 %v511
    %1174 = vmatmul.mubr.bf16.gmra.mrb[0].mxu0 %v510
    %v1175 = vpop.f32.mrb[0].mxu0
    %v1176 = vadd.f32 %v619, %v1175
    %v1177 = vpop.f32.mrb[0].mxu0
    %v1178 = vadd.f32 %v623, %v1177
    %v1179 = vpop.f32.mrb[0].mxu0
    %v1180 = vadd.f32 %v619, %v1179
    %v1181 = vpop.f32.mrb[0].mxu0
    %v1182 = vadd.f32 %v623, %v1181
    %1183 = vmatprep.mubr.bf16.mxu0 %v513
    %1184 = vmatmul.mubr.bf16.gmra.mrb[0].mxu0 %v512
    %v1185 = vpop.f32.mrb[0].mxu0
    %v1186 = vadd.f32 %v619, %v1185
    %v1187 = vpop.f32.mrb[0].mxu0
    %v1188 = vadd.f32 %v623, %v1187
    %v1189 = vpop.f32.mrb[0].mxu0
    %v1190 = vadd.f32 %v619, %v1189
    %v1191 = vpop.f32.mrb[0].mxu0
    %v1192 = vadd.f32 %v623, %v1191
    %1193 = vmatprep.mubr.bf16.mxu0 %v515
    %1194 = vmatmul.mubr.bf16.gmra.mrb[0].mxu0 %v514
    %v1195 = vpop.f32.mrb[0].mxu0
    %v1196 = vadd.f32 %v619, %v1195
    %v1197 = vpop.f32.mrb[0].mxu0
    %v1198 = vadd.f32 %v623, %v1197
    %v1199 = vpop.f32.mrb[0].mxu0
    %v1200 = vadd.f32 %v619, %v1199
    %v1201 = vpop.f32.mrb[0].mxu0
    %v1202 = vadd.f32 %v623, %v1201
    %1203 = vmatprep.mubr.bf16.mxu0 %v517
    %1204 = vmatmul.mubr.bf16.gmra.mrb[0].mxu0 %v516
    %v1205 = vpop.f32.mrb[0].mxu0
    %v1206 = vadd.f32 %v619, %v1205
    %v1207 = vpop.f32.mrb[0].mxu0
    %v1208 = vadd.f32 %v623, %v1207
    %v1209 = vpop.f32.mrb[0].mxu0
    %v1210 = vadd.f32 %v619, %v1209
    %v1211 = vpop.f32.mrb[0].mxu0
    %v1212 = vadd.f32 %v623, %v1211
    %1213 = vmatprep.mubr.bf16.mxu0 %v519
    %1214 = vmatmul.mubr.bf16.gmra.mrb[0].mxu0 %v518
    %v1215 = vpop.f32.mrb[0].mxu0
    %v1216 = vadd.f32 %v619, %v1215
    %v1217 = vpop.f32.mrb[0].mxu0
    %v1218 = vadd.f32 %v623, %v1217
    %v1219 = vpop.f32.mrb[0].mxu0
    %v1220 = vadd.f32 %v619, %v1219
    %v1221 = vpop.f32.mrb[0].mxu0
    %v1222 = vadd.f32 %v623, %v1221
    %1223 = vmatprep.mubr.bf16.mxu0 %v521
    %1224 = vmatmul.mubr.bf16.gmra.mrb[0].mxu0 %v520
    %v1225 = vpop.f32.mrb[0].mxu0
    %v1226 = vadd.f32 %v619, %v1225
    %v1227 = vpop.f32.mrb[0].mxu0
    %v1228 = vadd.f32 %v623, %v1227
    %v1229 = vpop.f32.mrb[0].mxu0
    %v1230 = vadd.f32 %v619, %v1229
    %v1231 = vpop.f32.mrb[0].mxu0
    %v1232 = vadd.f32 %v623, %v1231
    %1233 = vmatprep.mubr.bf16.mxu0 %v523
    %1234 = vmatmul.mubr.bf16.gmra.mrb[0].mxu0 %v522
    %v1235 = vpop.f32.mrb[0].mxu0
    %v1236 = vadd.f32 %v619, %v1235
    %v1237 = vpop.f32.mrb[0].mxu0
    %v1238 = vadd.f32 %v623, %v1237
    %v1239 = vpop.f32.mrb[0].mxu0
    %v1240 = vadd.f32 %v619, %v1239
    %v1241 = vpop.f32.mrb[0].mxu0
    %v1242 = vadd.f32 %v623, %v1241
    %1243 = vmatprep.mubr.bf16.mxu0 %v525
    %1244 = vmatmul.mubr.bf16.gmra.mrb[0].mxu0 %v524
    %v1245 = vpop.f32.mrb[0].mxu0
    %v1246 = vadd.f32 %v619, %v1245
    %v1247 = vpop.f32.mrb[0].mxu0
    %v1248 = vadd.f32 %v623, %v1247
    %v1249 = vpop.f32.mrb[0].mxu0
    %v1250 = vadd.f32 %v619, %v1249
    %v1251 = vpop.f32.mrb[0].mxu0
    %v1252 = vadd.f32 %v623, %v1251
    %1253 = vmatprep.mubr.bf16.mxu0 %v527
    %1254 = vmatmul.mubr.bf16.gmra.mrb[0].mxu0 %v526
    %v1255 = vpop.f32.mrb[0].mxu0
    %v1256 = vadd.f32 %v619, %v1255
    %v1257 = vpop.f32.mrb[0].mxu0
    %v1258 = vadd.f32 %v623, %v1257
    %v1259 = vpop.f32.mrb[0].mxu0
    %v1260 = vadd.f32 %v619, %v1259
    %v1261 = vpop.f32.mrb[0].mxu0
    %v1262 = vadd.f32 %v623, %v1261
    %1263 = vmatprep.mubr.bf16.mxu0 %v529
    %1264 = vmatmul.mubr.bf16.gmra.mrb[0].mxu0 %v528
    %v1265 = vpop.f32.mrb[0].mxu0
    %v1266 = vadd.f32 %v619, %v1265
    %v1267 = vpop.f32.mrb[0].mxu0
    %v1268 = vadd.f32 %v623, %v1267
    %v1269 = vpop.f32.mrb[0].mxu0
    %v1270 = vadd.f32 %v619, %v1269
    %v1271 = vpop.f32.mrb[0].mxu0
    %v1272 = vadd.f32 %v623, %v1271
    %1273 = vmatprep.mubr.bf16.mxu0 %v531
    %1274 = vmatmul.mubr.bf16.gmra.mrb[0].mxu0 %v530
    %v1275 = vpop.f32.mrb[0].mxu0
    %v1276 = vadd.f32 %v619, %v1275
    %v1277 = vpop.f32.mrb[0].mxu0
    %v1278 = vadd.f32 %v623, %v1277
    %v1279 = vpop.f32.mrb[0].mxu0
    %v1280 = vadd.f32 %v619, %v1279
    %v1281 = vpop.f32.mrb[0].mxu0
    %v1282 = vadd.f32 %v623, %v1281
    %1283 = vmatprep.mubr.bf16.mxu0 %v533
    %1284 = vmatmul.mubr.bf16.gmra.mrb[0].mxu0 %v532
    %v1285 = vpop.f32.mrb[0].mxu0
    %v1286 = vadd.f32 %v619, %v1285
    %v1287 = vpop.f32.mrb[0].mxu0
    %v1288 = vadd.f32 %v623, %v1287
    %v1289 = vpop.f32.mrb[0].mxu0
    %v1290 = vadd.f32 %v619, %v1289
    %v1291 = vpop.f32.mrb[0].mxu0
    %v1292 = vadd.f32 %v623, %v1291
    %1293 = vmatprep.mubr.bf16.mxu0 %v535
    %1294 = vmatmul.mubr.bf16.gmra.mrb[0].mxu0 %v534
    %v1295 = vpop.f32.mrb[0].mxu0
    %v1296 = vadd.f32 %v619, %v1295
    %v1297 = vpop.f32.mrb[0].mxu0
    %v1298 = vadd.f32 %v623, %v1297
    %v1299 = vpop.f32.mrb[0].mxu0
    %v1300 = vadd.f32 %v619, %v1299
    %v1301 = vpop.f32.mrb[0].mxu0
    %v1302 = vadd.f32 %v623, %v1301
    %1303 = vmatprep.mubr.bf16.mxu0 %v537
    %1304 = vmatmul.mubr.bf16.gmra.mrb[0].mxu0 %v536
    %v1305 = vpop.f32.mrb[0].mxu0
    %v1306 = vadd.f32 %v619, %v1305
    %v1307 = vpop.f32.mrb[0].mxu0
    %v1308 = vadd.f32 %v623, %v1307
    %v1309 = vpop.f32.mrb[0].mxu0
    %v1310 = vadd.f32 %v619, %v1309
    %v1311 = vpop.f32.mrb[0].mxu0
    %v1312 = vadd.f32 %v623, %v1311
    %1313 = vmatprep.mubr.bf16.mxu0 %v539
    %1314 = vmatmul.mubr.bf16.gmra.mrb[0].mxu0 %v538
    %v1315 = vpop.f32.mrb[0].mxu0
    %v1316 = vadd.f32 %v619, %v1315
    %v1317 = vpop.f32.mrb[0].mxu0
    %v1318 = vadd.f32 %v623, %v1317
    %v1319 = vpop.f32.mrb[0].mxu0
    %v1320 = vadd.f32 %v619, %v1319
    %v1321 = vpop.f32.mrb[0].mxu0
    %v1322 = vadd.f32 %v623, %v1321
    %1323 = vmatprep.mubr.bf16.mxu0 %v541
    %1324 = vmatmul.mubr.bf16.gmra.mrb[0].mxu0 %v540
    %v1325 = vpop.f32.mrb[0].mxu0
    %v1326 = vadd.f32 %v619, %v1325
    %v1327 = vpop.f32.mrb[0].mxu0
    %v1328 = vadd.f32 %v623, %v1327
    %v1329 = vpop.f32.mrb[0].mxu0
    %v1330 = vadd.f32 %v619, %v1329
    %v1331 = vpop.f32.mrb[0].mxu0
    %v1332 = vadd.f32 %v623, %v1331
    %1333 = vdwg.mxu0
    %v1334 = vmax.f32 %v983, 0.0
    %v1335 = vmax.f32 %v985, 0.0
    %v1336 = vmax.f32 %v1176, 0.0
    %v1337 = vmax.f32 %v1178, 0.0
    %v1338 = vmax.f32 %v987, 0.0
    %v1339 = vmax.f32 %v989, 0.0
    %v1340 = vmax.f32 %v1180, 0.0
    %v1341 = vmax.f32 %v1182, 0.0
    %v1342 = vmax.f32 %v993, 0.0
    %v1343 = vmax.f32 %v995, 0.0
    %v1344 = vmax.f32 %v1186, 0.0
    %v1345 = vmax.f32 %v1188, 0.0
    %v1346 = vmax.f32 %v997, 0.0
    %v1347 = vmax.f32 %v999, 0.0
    %v1348 = vmax.f32 %v1190, 0.0
    %v1349 = vmax.f32 %v1192, 0.0
    %v1350 = vmax.f32 %v1003, 0.0
    %v1351 = vmax.f32 %v1005, 0.0
    %v1352 = vmax.f32 %v1196, 0.0
    %v1353 = vmax.f32 %v1198, 0.0
    %v1354 = vmax.f32 %v1007, 0.0
    %v1355 = vmax.f32 %v1009, 0.0
    %v1356 = vmax.f32 %v1200, 0.0
    %v1357 = vmax.f32 %v1202, 0.0
    %v1358 = vmax.f32 %v1013, 0.0
    %v1359 = vmax.f32 %v1015, 0.0
    %v1360 = vmax.f32 %v1206, 0.0
    %v1361 = vmax.f32 %v1208, 0.0
    %v1362 = vmax.f32 %v1017, 0.0
    %v1363 = vmax.f32 %v1019, 0.0
    %v1364 = vmax.f32 %v1210, 0.0
    %v1365 = vmax.f32 %v1212, 0.0
    %v1366 = vmax.f32 %v1023, 0.0
    %v1367 = vmax.f32 %v1025, 0.0
    %v1368 = vmax.f32 %v1216, 0.0
    %v1369 = vmax.f32 %v1218, 0.0
    %v1370 = vmax.f32 %v1027, 0.0
    %v1371 = vmax.f32 %v1029, 0.0
    %v1372 = vmax.f32 %v1220, 0.0
    %v1373 = vmax.f32 %v1222, 0.0
    %v1374 = vmax.f32 %v1033, 0.0
    %v1375 = vmax.f32 %v1035, 0.0
    %v1376 = vmax.f32 %v1226, 0.0
    %v1377 = vmax.f32 %v1228, 0.0
    %v1378 = vmax.f32 %v1037, 0.0
    %v1379 = vmax.f32 %v1039, 0.0
    %v1380 = vmax.f32 %v1230, 0.0
    %v1381 = vmax.f32 %v1232, 0.0
    %v1382 = vmax.f32 %v1043, 0.0
    %v1383 = vmax.f32 %v1045, 0.0
    %v1384 = vmax.f32 %v1236, 0.0
    %v1385 = vmax.f32 %v1238, 0.0
    %v1386 = vmax.f32 %v1047, 0.0
    %v1387 = vmax.f32 %v1049, 0.0
    %v1388 = vmax.f32 %v1240, 0.0
    %v1389 = vmax.f32 %v1242, 0.0
    %v1390 = vmax.f32 %v1053, 0.0
    %v1391 = vmax.f32 %v1055, 0.0
    %v1392 = vmax.f32 %v1246, 0.0
    %v1393 = vmax.f32 %v1248, 0.0
    %v1394 = vmax.f32 %v1057, 0.0
    %v1395 = vmax.f32 %v1059, 0.0
    %v1396 = vmax.f32 %v1250, 0.0
    %v1397 = vmax.f32 %v1252, 0.0
    %v1398 = vmax.f32 %v1063, 0.0
    %v1399 = vmax.f32 %v1065, 0.0
    %v1400 = vmax.f32 %v1256, 0.0
    %v1401 = vmax.f32 %v1258, 0.0
    %v1402 = vmax.f32 %v1067, 0.0
    %v1403 = vmax.f32 %v1069, 0.0
    %v1404 = vmax.f32 %v1260, 0.0
    %v1405 = vmax.f32 %v1262, 0.0
    %v1406 = vmax.f32 %v1073, 0.0
    %v1407 = vmax.f32 %v1075, 0.0
    %v1408 = vmax.f32 %v1266, 0.0
    %v1409 = vmax.f32 %v1268, 0.0
    %v1410 = vmax.f32 %v1077, 0.0
    %v1411 = vmax.f32 %v1079, 0.0
    %v1412 = vmax.f32 %v1270, 0.0
    %v1413 = vmax.f32 %v1272, 0.0
    %v1414 = vmax.f32 %v1083, 0.0
    %v1415 = vmax.f32 %v1085, 0.0
    %v1416 = vmax.f32 %v1276, 0.0
    %v1417 = vmax.f32 %v1278, 0.0
    %v1418 = vmax.f32 %v1087, 0.0
    %v1419 = vmax.f32 %v1089, 0.0
    %v1420 = vmax.f32 %v1280, 0.0
    %v1421 = vmax.f32 %v1282, 0.0
    %v1422 = vmax.f32 %v1093, 0.0
    %v1423 = vmax.f32 %v1095, 0.0
    %v1424 = vmax.f32 %v1286, 0.0
    %v1425 = vmax.f32 %v1288, 0.0
    %v1426 = vmax.f32 %v1097, 0.0
    %v1427 = vmax.f32 %v1099, 0.0
    %v1428 = vmax.f32 %v1290, 0.0
    %v1429 = vmax.f32 %v1292, 0.0
    %v1430 = vmax.f32 %v1103, 0.0
    %v1431 = vmax.f32 %v1105, 0.0
    %v1432 = vmax.f32 %v1296, 0.0
    %v1433 = vmax.f32 %v1298, 0.0
    %v1434 = vmax.f32 %v1107, 0.0
    %v1435 = vmax.f32 %v1109, 0.0
    %v1436 = vmax.f32 %v1300, 0.0
    %v1437 = vmax.f32 %v1302, 0.0
    %v1438 = vmax.f32 %v1113, 0.0
    %v1439 = vmax.f32 %v1115, 0.0
    %v1440 = vmax.f32 %v1306, 0.0
    %v1441 = vmax.f32 %v1308, 0.0
    %v1442 = vmax.f32 %v1117, 0.0
    %v1443 = vmax.f32 %v1119, 0.0
    %v1444 = vmax.f32 %v1310, 0.0
    %v1445 = vmax.f32 %v1312, 0.0
    %v1446 = vmax.f32 %v1123, 0.0
    %v1447 = vmax.f32 %v1125, 0.0
    %v1448 = vmax.f32 %v1316, 0.0
    %v1449 = vmax.f32 %v1318, 0.0
    %v1450 = vmax.f32 %v1127, 0.0
    %v1451 = vmax.f32 %v1129, 0.0
    %v1452 = vmax.f32 %v1320, 0.0
    %v1453 = vmax.f32 %v1322, 0.0
    %v1454 = vmax.f32 %v1133, 0.0
    %v1455 = vmax.f32 %v1135, 0.0
    %v1456 = vmax.f32 %v1326, 0.0
    %v1457 = vmax.f32 %v1328, 0.0
    %v1458 = vmax.f32 %v1137, 0.0
    %v1459 = vmax.f32 %v1139, 0.0
    %v1460 = vmax.f32 %v1330, 0.0
    %v1461 = vmax.f32 %v1332, 0.0
    %v1462 = vpack.c.bf16 %v1338, %v1334
    %v1463 = vpack.c.bf16 %v1339, %v1335
    %v1464 = vpack.c.bf16 %v1340, %v1336
    %v1465 = vpack.c.bf16 %v1341, %v1337
    %v1466 = vpack.c.bf16 %v1346, %v1342
    %v1467 = vpack.c.bf16 %v1347, %v1343
    %v1468 = vpack.c.bf16 %v1348, %v1344
    %v1469 = vpack.c.bf16 %v1349, %v1345
    %v1470 = vpack.c.bf16 %v1354, %v1350
    %v1471 = vpack.c.bf16 %v1355, %v1351
    %v1472 = vpack.c.bf16 %v1356, %v1352
    %v1473 = vpack.c.bf16 %v1357, %v1353
    %v1474 = vpack.c.bf16 %v1362, %v1358
    %v1475 = vpack.c.bf16 %v1363, %v1359
    %v1476 = vpack.c.bf16 %v1364, %v1360
    %v1477 = vpack.c.bf16 %v1365, %v1361
    %v1478 = vpack.c.bf16 %v1370, %v1366
    %v1479 = vpack.c.bf16 %v1371, %v1367
    %v1480 = vpack.c.bf16 %v1372, %v1368
    %v1481 = vpack.c.bf16 %v1373, %v1369
    %v1482 = vpack.c.bf16 %v1378, %v1374
    %v1483 = vpack.c.bf16 %v1379, %v1375
    %v1484 = vpack.c.bf16 %v1380, %v1376
    %v1485 = vpack.c.bf16 %v1381, %v1377
    %v1486 = vpack.c.bf16 %v1386, %v1382
    %v1487 = vpack.c.bf16 %v1387, %v1383
    %v1488 = vpack.c.bf16 %v1388, %v1384
    %v1489 = vpack.c.bf16 %v1389, %v1385
    %v1490 = vpack.c.bf16 %v1394, %v1390
    %v1491 = vpack.c.bf16 %v1395, %v1391
    %v1492 = vpack.c.bf16 %v1396, %v1392
    %v1493 = vpack.c.bf16 %v1397, %v1393
    %v1494 = vpack.c.bf16 %v1402, %v1398
    %v1495 = vpack.c.bf16 %v1403, %v1399
    %v1496 = vpack.c.bf16 %v1404, %v1400
    %v1497 = vpack.c.bf16 %v1405, %v1401
    %v1498 = vpack.c.bf16 %v1410, %v1406
    %v1499 = vpack.c.bf16 %v1411, %v1407
    %v1500 = vpack.c.bf16 %v1412, %v1408
    %v1501 = vpack.c.bf16 %v1413, %v1409
    %v1502 = vpack.c.bf16 %v1418, %v1414
    %v1503 = vpack.c.bf16 %v1419, %v1415
    %v1504 = vpack.c.bf16 %v1420, %v1416
    %v1505 = vpack.c.bf16 %v1421, %v1417
    %v1506 = vpack.c.bf16 %v1426, %v1422
    %v1507 = vpack.c.bf16 %v1427, %v1423
    %v1508 = vpack.c.bf16 %v1428, %v1424
    %v1509 = vpack.c.bf16 %v1429, %v1425
    %v1510 = vpack.c.bf16 %v1434, %v1430
    %v1511 = vpack.c.bf16 %v1435, %v1431
    %v1512 = vpack.c.bf16 %v1436, %v1432
    %v1513 = vpack.c.bf16 %v1437, %v1433
    %v1514 = vpack.c.bf16 %v1442, %v1438
    %v1515 = vpack.c.bf16 %v1443, %v1439
    %v1516 = vpack.c.bf16 %v1444, %v1440
    %v1517 = vpack.c.bf16 %v1445, %v1441
    %v1518 = vpack.c.bf16 %v1450, %v1446
    %v1519 = vpack.c.bf16 %v1451, %v1447
    %v1520 = vpack.c.bf16 %v1452, %v1448
    %v1521 = vpack.c.bf16 %v1453, %v1449
    %v1522 = vpack.c.bf16 %v1458, %v1454
    %v1523 = vpack.c.bf16 %v1459, %v1455
    %v1524 = vpack.c.bf16 %v1460, %v1456
    %v1525 = vpack.c.bf16 %v1461, %v1457
    %v1526 = vld [vmem:[#allocation5] sm:$0xf]
    %v1527 = vld [vmem:[#allocation5 + $0x4] sm:$0xf]
    %v1528 = vld [vmem:[#allocation5 + $0x8] sm:$0xf]
    %v1529 = vld [vmem:[#allocation5 + $0xc] sm:$0xf]
    %v1530 = vld [vmem:[#allocation5 + $0x10] sm:$0xf]
    %v1531 = vld [vmem:[#allocation5 + $0x14] sm:$0xf]
    %v1532 = vld [vmem:[#allocation5 + $0x18] sm:$0xf]
    %v1533 = vld [vmem:[#allocation5 + $0x1c] sm:$0xf]
    %v1534 = vld [vmem:[#allocation5 + $0x20] sm:$0xf]
    %v1535 = vld [vmem:[#allocation5 + $0x24] sm:$0xf]
    %v1536 = vld [vmem:[#allocation5 + $0x28] sm:$0xf]
    %v1537 = vld [vmem:[#allocation5 + $0x2c] sm:$0xf]
    %v1538 = vld [vmem:[#allocation5 + $0x30] sm:$0xf]
    %v1539 = vld [vmem:[#allocation5 + $0x34] sm:$0xf]
    %v1540 = vld [vmem:[#allocation5 + $0x38] sm:$0xf]
    %v1541 = vld [vmem:[#allocation5 + $0x3c] sm:$0xf]
    %v1542 = vld [vmem:[#allocation5 + $0x40] sm:$0xf]
    %v1543 = vld [vmem:[#allocation5 + $0x44] sm:$0xf]
    %v1544 = vld [vmem:[#allocation5 + $0x48] sm:$0xf]
    %v1545 = vld [vmem:[#allocation5 + $0x4c] sm:$0xf]
    %v1546 = vld [vmem:[#allocation5 + $0x50] sm:$0xf]
    %v1547 = vld [vmem:[#allocation5 + $0x54] sm:$0xf]
    %v1548 = vld [vmem:[#allocation5 + $0x58] sm:$0xf]
    %v1549 = vld [vmem:[#allocation5 + $0x5c] sm:$0xf]
    %v1550 = vld [vmem:[#allocation5 + $0x60] sm:$0xf]
    %v1551 = vld [vmem:[#allocation5 + $0x64] sm:$0xf]
    %v1552 = vld [vmem:[#allocation5 + $0x68] sm:$0xf]
    %v1553 = vld [vmem:[#allocation5 + $0x6c] sm:$0xf]
    %v1554 = vld [vmem:[#allocation5 + $0x70] sm:$0xf]
    %v1555 = vld [vmem:[#allocation5 + $0x74] sm:$0xf]
    %v1556 = vld [vmem:[#allocation5 + $0x78] sm:$0xf]
    %v1557 = vld [vmem:[#allocation5 + $0x7c] sm:$0xf]
    %v1558 = vld [vmem:[#allocation5 + $0x80] sm:$0xf]
    %v1559 = vld [vmem:[#allocation5 + $0x84] sm:$0xf]
    %v1560 = vld [vmem:[#allocation5 + $0x88] sm:$0xf]
    %v1561 = vld [vmem:[#allocation5 + $0x8c] sm:$0xf]
    %v1562 = vld [vmem:[#allocation5 + $0x90] sm:$0xf]
    %v1563 = vld [vmem:[#allocation5 + $0x94] sm:$0xf]
    %v1564 = vld [vmem:[#allocation5 + $0x98] sm:$0xf]
    %v1565 = vld [vmem:[#allocation5 + $0x9c] sm:$0xf]
    %v1566 = vld [vmem:[#allocation5 + $0xa0] sm:$0xf]
    %v1567 = vld [vmem:[#allocation5 + $0xa4] sm:$0xf]
    %v1568 = vld [vmem:[#allocation5 + $0xa8] sm:$0xf]
    %v1569 = vld [vmem:[#allocation5 + $0xac] sm:$0xf]
    %v1570 = vld [vmem:[#allocation5 + $0xb0] sm:$0xf]
    %v1571 = vld [vmem:[#allocation5 + $0xb4] sm:$0xf]
    %v1572 = vld [vmem:[#allocation5 + $0xb8] sm:$0xf]
    %v1573 = vld [vmem:[#allocation5 + $0xbc] sm:$0xf]
    %v1574 = vld [vmem:[#allocation5 + $0xc0] sm:$0xf]
    %v1575 = vld [vmem:[#allocation5 + $0xc4] sm:$0xf]
    %v1576 = vld [vmem:[#allocation5 + $0xc8] sm:$0xf]
    %v1577 = vld [vmem:[#allocation5 + $0xcc] sm:$0xf]
    %v1578 = vld [vmem:[#allocation5 + $0xd0] sm:$0xf]
    %v1579 = vld [vmem:[#allocation5 + $0xd4] sm:$0xf]
    %v1580 = vld [vmem:[#allocation5 + $0xd8] sm:$0xf]
    %v1581 = vld [vmem:[#allocation5 + $0xdc] sm:$0xf]
    %v1582 = vld [vmem:[#allocation5 + $0xe0] sm:$0xf]
    %v1583 = vld [vmem:[#allocation5 + $0xe4] sm:$0xf]
    %v1584 = vld [vmem:[#allocation5 + $0xe8] sm:$0xf]
    %v1585 = vld [vmem:[#allocation5 + $0xec] sm:$0xf]
    %v1586 = vld [vmem:[#allocation5 + $0xf0] sm:$0xf]
    %v1587 = vld [vmem:[#allocation5 + $0xf4] sm:$0xf]
    %v1588 = vld [vmem:[#allocation5 + $0xf8] sm:$0xf]
    %v1589 = vld [vmem:[#allocation5 + $0xfc] sm:$0xf]
    %v1590 = vld [vmem:[%s6] sm:$0x1]
    %v1592 = vlaneseq
    %v1593 = vshrl.u32 %v1592, 7
    %v1594 = vsub.s32 0, %v1593
    %v1595 = vrot.slane %v1590, %v1594
    %v1661 = vunpack.c.l.b16 %v1526
    %v1662 = vunpack.c.l.b16 %v1527
    %v1663 = vunpack.c.l.b16 %v1528
    %v1664 = vunpack.c.l.b16 %v1529
    %v1665 = vunpack.c.l.b16 %v1530
    %v1666 = vunpack.c.l.b16 %v1531
    %v1667 = vunpack.c.l.b16 %v1532
    %v1668 = vunpack.c.l.b16 %v1533
    %v1669 = vunpack.c.l.b16 %v1534
    %v1670 = vunpack.c.l.b16 %v1535
    %v1671 = vunpack.c.l.b16 %v1536
    %v1672 = vunpack.c.l.b16 %v1537
    %v1673 = vunpack.c.l.b16 %v1538
    %v1674 = vunpack.c.l.b16 %v1539
    %v1675 = vunpack.c.l.b16 %v1540
    %v1676 = vunpack.c.l.b16 %v1541
    %v1677 = vunpack.c.l.b16 %v1542
    %v1678 = vunpack.c.l.b16 %v1543
    %v1679 = vunpack.c.l.b16 %v1544
    %v1680 = vunpack.c.l.b16 %v1545
    %v1681 = vunpack.c.l.b16 %v1546
    %v1682 = vunpack.c.l.b16 %v1547
    %v1683 = vunpack.c.l.b16 %v1548
    %v1684 = vunpack.c.l.b16 %v1549
    %v1685 = vunpack.c.l.b16 %v1550
    %v1686 = vunpack.c.l.b16 %v1551
    %v1687 = vunpack.c.l.b16 %v1552
    %v1688 = vunpack.c.l.b16 %v1553
    %v1689 = vunpack.c.l.b16 %v1554
    %v1690 = vunpack.c.l.b16 %v1555
    %v1691 = vunpack.c.l.b16 %v1556
    %v1692 = vunpack.c.l.b16 %v1557
    %v1693 = vunpack.c.l.b16 %v1558
    %v1694 = vunpack.c.l.b16 %v1559
    %v1695 = vunpack.c.l.b16 %v1560
    %v1696 = vunpack.c.l.b16 %v1561
    %v1697 = vunpack.c.l.b16 %v1562
    %v1698 = vunpack.c.l.b16 %v1563
    %v1699 = vunpack.c.l.b16 %v1564
    %v1700 = vunpack.c.l.b16 %v1565
    %v1701 = vunpack.c.l.b16 %v1566
    %v1702 = vunpack.c.l.b16 %v1567
    %v1703 = vunpack.c.l.b16 %v1568
    %v1704 = vunpack.c.l.b16 %v1569
    %v1705 = vunpack.c.l.b16 %v1570
    %v1706 = vunpack.c.l.b16 %v1571
    %v1707 = vunpack.c.l.b16 %v1572
    %v1708 = vunpack.c.l.b16 %v1573
    %v1709 = vunpack.c.l.b16 %v1574
    %v1710 = vunpack.c.l.b16 %v1575
    %v1711 = vunpack.c.l.b16 %v1576
    %v1712 = vunpack.c.l.b16 %v1577
    %v1713 = vunpack.c.l.b16 %v1578
    %v1714 = vunpack.c.l.b16 %v1579
    %v1715 = vunpack.c.l.b16 %v1580
    %v1716 = vunpack.c.l.b16 %v1581
    %v1717 = vunpack.c.l.b16 %v1582
    %v1718 = vunpack.c.l.b16 %v1583
    %v1719 = vunpack.c.l.b16 %v1584
    %v1720 = vunpack.c.l.b16 %v1585
    %v1721 = vunpack.c.l.b16 %v1586
    %v1722 = vunpack.c.l.b16 %v1587
    %v1723 = vunpack.c.l.b16 %v1588
    %v1724 = vunpack.c.l.b16 %v1589
    %v1725 = vpack.c.b16 %v1662, %v1661
    %v1726 = vpack.c.b16 %v1664, %v1663
    %v1727 = vpack.c.b16 %v1666, %v1665
    %v1728 = vpack.c.b16 %v1668, %v1667
    %v1729 = vpack.c.b16 %v1670, %v1669
    %v1730 = vpack.c.b16 %v1672, %v1671
    %v1731 = vpack.c.b16 %v1674, %v1673
    %v1732 = vpack.c.b16 %v1676, %v1675
    %v1733 = vpack.c.b16 %v1678, %v1677
    %v1734 = vpack.c.b16 %v1680, %v1679
    %v1735 = vpack.c.b16 %v1682, %v1681
    %v1736 = vpack.c.b16 %v1684, %v1683
    %v1737 = vpack.c.b16 %v1686, %v1685
    %v1738 = vpack.c.b16 %v1688, %v1687
    %v1739 = vpack.c.b16 %v1690, %v1689
    %v1740 = vpack.c.b16 %v1692, %v1691
    %v1741 = vpack.c.b16 %v1694, %v1693
    %v1742 = vpack.c.b16 %v1696, %v1695
    %v1743 = vpack.c.b16 %v1698, %v1697
    %v1744 = vpack.c.b16 %v1700, %v1699
    %v1745 = vpack.c.b16 %v1702, %v1701
    %v1746 = vpack.c.b16 %v1704, %v1703
    %v1747 = vpack.c.b16 %v1706, %v1705
    %v1748 = vpack.c.b16 %v1708, %v1707
    %v1749 = vpack.c.b16 %v1710, %v1709
    %v1750 = vpack.c.b16 %v1712, %v1711
    %v1751 = vpack.c.b16 %v1714, %v1713
    %v1752 = vpack.c.b16 %v1716, %v1715
    %v1753 = vpack.c.b16 %v1718, %v1717
    %v1754 = vpack.c.b16 %v1720, %v1719
    %v1755 = vpack.c.b16 %v1722, %v1721
    %v1756 = vpack.c.b16 %v1724, %v1723
    %1789 = vmatprep.subr.bf16.mxu0 0
    %1790 = vmatpush1.bf16.msra.mxu0 %v1725
    %1791 = vmatprep.subr.bf16.mxu0 0
    %1792 = vmatpush1.bf16.msra.mxu0 %v1726
    %1793 = vmatprep.subr.bf16.mxu0 0
    %1794 = vmatpush1.bf16.msra.mxu0 %v1727
    %1795 = vmatprep.subr.bf16.mxu0 0
    %1796 = vmatpush1.bf16.msra.mxu0 %v1728
    %1797 = vmatprep.subr.bf16.mxu0 0
    %1798 = vmatpush1.bf16.msra.mxu0 %v1729
    %1799 = vmatprep.subr.bf16.mxu0 0
    %1800 = vmatpush1.bf16.msra.mxu0 %v1730
    %1801 = vmatprep.subr.bf16.mxu0 0
    %1802 = vmatpush1.bf16.msra.mxu0 %v1731
    %1803 = vmatprep.subr.bf16.mxu0 0
    %1804 = vmatpush1.bf16.msra.mxu0 %v1732
    %1805 = vmatprep.subr.bf16.mxu0 0
    %1806 = vmatpush1.bf16.msra.mxu0 %v1733
    %1807 = vmatprep.subr.bf16.mxu0 0
    %1808 = vmatpush1.bf16.msra.mxu0 %v1734
    %1809 = vmatprep.subr.bf16.mxu0 0
    %1810 = vmatpush1.bf16.msra.mxu0 %v1735
    %1811 = vmatprep.subr.bf16.mxu0 0
    %1812 = vmatpush1.bf16.msra.mxu0 %v1736
    %1813 = vmatprep.subr.bf16.mxu0 0
    %1814 = vmatpush1.bf16.msra.mxu0 %v1737
    %1815 = vmatprep.subr.bf16.mxu0 0
    %1816 = vmatpush1.bf16.msra.mxu0 %v1738
    %1817 = vmatprep.subr.bf16.mxu0 0
    %1818 = vmatpush1.bf16.msra.mxu0 %v1739
    %1819 = vmatprep.subr.bf16.mxu0 0
    %1820 = vmatpush1.bf16.msra.mxu0 %v1740
    %1821 = vmatprep.mubr.bf16.mxu0 %v1463
    %1822 = vmatmul.mubr.bf16.gmra.mrb[0].mxu0 %v1462
    %v1823 = vpop.f32.mrb[0].mxu0
    %v1824 = vadd.f32 %v1595, %v1823
    %v1825 = vpop.f32.mrb[0].mxu0
    %v1826 = vpop.f32.mrb[0].mxu0
    %v1827 = vadd.f32 %v1595, %v1826
    %v1828 = vpop.f32.mrb[0].mxu0
    %1829 = vmatprep.mubr.bf16.mxu0 %v1467
    %1830 = vmatmul.mubr.bf16.gmra.mrb[0].mxu0 %v1466
    %v1831 = vpop.f32.mrb[0].mxu0
    %v1832 = vadd.f32 %v1595, %v1831
    %v1833 = vpop.f32.mrb[0].mxu0
    %v1834 = vpop.f32.mrb[0].mxu0
    %v1835 = vadd.f32 %v1595, %v1834
    %v1836 = vpop.f32.mrb[0].mxu0
    %1837 = vmatprep.mubr.bf16.mxu0 %v1471
    %1838 = vmatmul.mubr.bf16.gmra.mrb[0].mxu0 %v1470
    %v1839 = vpop.f32.mrb[0].mxu0
    %v1840 = vadd.f32 %v1595, %v1839
    %v1841 = vpop.f32.mrb[0].mxu0
    %v1842 = vpop.f32.mrb[0].mxu0
    %v1843 = vadd.f32 %v1595, %v1842
    %v1844 = vpop.f32.mrb[0].mxu0
    %1845 = vmatprep.mubr.bf16.mxu0 %v1475
    %1846 = vmatmul.mubr.bf16.gmra.mrb[0].mxu0 %v1474
    %v1847 = vpop.f32.mrb[0].mxu0
    %v1848 = vadd.f32 %v1595, %v1847
    %v1849 = vpop.f32.mrb[0].mxu0
    %v1850 = vpop.f32.mrb[0].mxu0
    %v1851 = vadd.f32 %v1595, %v1850
    %v1852 = vpop.f32.mrb[0].mxu0
    %1853 = vmatprep.mubr.bf16.mxu0 %v1479
    %1854 = vmatmul.mubr.bf16.gmra.mrb[0].mxu0 %v1478
    %v1855 = vpop.f32.mrb[0].mxu0
    %v1856 = vadd.f32 %v1595, %v1855
    %v1857 = vpop.f32.mrb[0].mxu0
    %v1858 = vpop.f32.mrb[0].mxu0
    %v1859 = vadd.f32 %v1595, %v1858
    %v1860 = vpop.f32.mrb[0].mxu0
    %1861 = vmatprep.mubr.bf16.mxu0 %v1483
    %1862 = vmatmul.mubr.bf16.gmra.mrb[0].mxu0 %v1482
    %v1863 = vpop.f32.mrb[0].mxu0
    %v1864 = vadd.f32 %v1595, %v1863
    %v1865 = vpop.f32.mrb[0].mxu0
    %v1866 = vpop.f32.mrb[0].mxu0
    %v1867 = vadd.f32 %v1595, %v1866
    %v1868 = vpop.f32.mrb[0].mxu0
    %1869 = vmatprep.mubr.bf16.mxu0 %v1487
    %1870 = vmatmul.mubr.bf16.gmra.mrb[0].mxu0 %v1486
    %v1871 = vpop.f32.mrb[0].mxu0
    %v1872 = vadd.f32 %v1595, %v1871
    %v1873 = vpop.f32.mrb[0].mxu0
    %v1874 = vpop.f32.mrb[0].mxu0
    %v1875 = vadd.f32 %v1595, %v1874
    %v1876 = vpop.f32.mrb[0].mxu0
    %1877 = vmatprep.mubr.bf16.mxu0 %v1491
    %1878 = vmatmul.mubr.bf16.gmra.mrb[0].mxu0 %v1490
    %v1879 = vpop.f32.mrb[0].mxu0
    %v1880 = vadd.f32 %v1595, %v1879
    %v1881 = vpop.f32.mrb[0].mxu0
    %v1882 = vpop.f32.mrb[0].mxu0
    %v1883 = vadd.f32 %v1595, %v1882
    %v1884 = vpop.f32.mrb[0].mxu0
    %1885 = vmatprep.mubr.bf16.mxu0 %v1495
    %1886 = vmatmul.mubr.bf16.gmra.mrb[0].mxu0 %v1494
    %v1887 = vpop.f32.mrb[0].mxu0
    %v1888 = vadd.f32 %v1595, %v1887
    %v1889 = vpop.f32.mrb[0].mxu0
    %v1890 = vpop.f32.mrb[0].mxu0
    %v1891 = vadd.f32 %v1595, %v1890
    %v1892 = vpop.f32.mrb[0].mxu0
    %1893 = vmatprep.mubr.bf16.mxu0 %v1499
    %1894 = vmatmul.mubr.bf16.gmra.mrb[0].mxu0 %v1498
    %v1895 = vpop.f32.mrb[0].mxu0
    %v1896 = vadd.f32 %v1595, %v1895
    %v1897 = vpop.f32.mrb[0].mxu0
    %v1898 = vpop.f32.mrb[0].mxu0
    %v1899 = vadd.f32 %v1595, %v1898
    %v1900 = vpop.f32.mrb[0].mxu0
    %1901 = vmatprep.mubr.bf16.mxu0 %v1503
    %1902 = vmatmul.mubr.bf16.gmra.mrb[0].mxu0 %v1502
    %v1903 = vpop.f32.mrb[0].mxu0
    %v1904 = vadd.f32 %v1595, %v1903
    %v1905 = vpop.f32.mrb[0].mxu0
    %v1906 = vpop.f32.mrb[0].mxu0
    %v1907 = vadd.f32 %v1595, %v1906
    %v1908 = vpop.f32.mrb[0].mxu0
    %1909 = vmatprep.mubr.bf16.mxu0 %v1507
    %1910 = vmatmul.mubr.bf16.gmra.mrb[0].mxu0 %v1506
    %v1911 = vpop.f32.mrb[0].mxu0
    %v1912 = vadd.f32 %v1595, %v1911
    %v1913 = vpop.f32.mrb[0].mxu0
    %v1914 = vpop.f32.mrb[0].mxu0
    %v1915 = vadd.f32 %v1595, %v1914
    %v1916 = vpop.f32.mrb[0].mxu0
    %1917 = vmatprep.mubr.bf16.mxu0 %v1511
    %1918 = vmatmul.mubr.bf16.gmra.mrb[0].mxu0 %v1510
    %v1919 = vpop.f32.mrb[0].mxu0
    %v1920 = vadd.f32 %v1595, %v1919
    %v1921 = vpop.f32.mrb[0].mxu0
    %v1922 = vpop.f32.mrb[0].mxu0
    %v1923 = vadd.f32 %v1595, %v1922
    %v1924 = vpop.f32.mrb[0].mxu0
    %1925 = vmatprep.mubr.bf16.mxu0 %v1515
    %1926 = vmatmul.mubr.bf16.gmra.mrb[0].mxu0 %v1514
    %v1927 = vpop.f32.mrb[0].mxu0
    %v1928 = vadd.f32 %v1595, %v1927
    %v1929 = vpop.f32.mrb[0].mxu0
    %v1930 = vpop.f32.mrb[0].mxu0
    %v1931 = vadd.f32 %v1595, %v1930
    %v1932 = vpop.f32.mrb[0].mxu0
    %1933 = vmatprep.mubr.bf16.mxu0 %v1519
    %1934 = vmatmul.mubr.bf16.gmra.mrb[0].mxu0 %v1518
    %v1935 = vpop.f32.mrb[0].mxu0
    %v1936 = vadd.f32 %v1595, %v1935
    %v1937 = vpop.f32.mrb[0].mxu0
    %v1938 = vpop.f32.mrb[0].mxu0
    %v1939 = vadd.f32 %v1595, %v1938
    %v1940 = vpop.f32.mrb[0].mxu0
    %1941 = vmatprep.mubr.bf16.mxu0 %v1523
    %1942 = vmatmul.mubr.bf16.gmra.mrb[0].mxu0 %v1522
    %v1943 = vpop.f32.mrb[0].mxu0
    %v1944 = vadd.f32 %v1595, %v1943
    %v1945 = vpop.f32.mrb[0].mxu0
    %v1946 = vpop.f32.mrb[0].mxu0
    %v1947 = vadd.f32 %v1595, %v1946
    %v1948 = vpop.f32.mrb[0].mxu0
    %1949 = vdwg.mxu0
    %1950 = vmatprep.subr.bf16.mxu0 0
    %1951 = vmatpush1.bf16.msra.mxu0 %v1741
    %1952 = vmatprep.subr.bf16.mxu0 0
    %1953 = vmatpush1.bf16.msra.mxu0 %v1742
    %1954 = vmatprep.subr.bf16.mxu0 0
    %1955 = vmatpush1.bf16.msra.mxu0 %v1743
    %1956 = vmatprep.subr.bf16.mxu0 0
    %1957 = vmatpush1.bf16.msra.mxu0 %v1744
    %1958 = vmatprep.subr.bf16.mxu0 0
    %1959 = vmatpush1.bf16.msra.mxu0 %v1745
    %1960 = vmatprep.subr.bf16.mxu0 0
    %1961 = vmatpush1.bf16.msra.mxu0 %v1746
    %1962 = vmatprep.subr.bf16.mxu0 0
    %1963 = vmatpush1.bf16.msra.mxu0 %v1747
    %1964 = vmatprep.subr.bf16.mxu0 0
    %1965 = vmatpush1.bf16.msra.mxu0 %v1748
    %1966 = vmatprep.subr.bf16.mxu0 0
    %1967 = vmatpush1.bf16.msra.mxu0 %v1749
    %1968 = vmatprep.subr.bf16.mxu0 0
    %1969 = vmatpush1.bf16.msra.mxu0 %v1750
    %1970 = vmatprep.subr.bf16.mxu0 0
    %1971 = vmatpush1.bf16.msra.mxu0 %v1751
    %1972 = vmatprep.subr.bf16.mxu0 0
    %1973 = vmatpush1.bf16.msra.mxu0 %v1752
    %1974 = vmatprep.subr.bf16.mxu0 0
    %1975 = vmatpush1.bf16.msra.mxu0 %v1753
    %1976 = vmatprep.subr.bf16.mxu0 0
    %1977 = vmatpush1.bf16.msra.mxu0 %v1754
    %1978 = vmatprep.subr.bf16.mxu0 0
    %1979 = vmatpush1.bf16.msra.mxu0 %v1755
    %1980 = vmatprep.subr.bf16.mxu0 0
    %1981 = vmatpush1.bf16.msra.mxu0 %v1756
    %1982 = vmatprep.mubr.bf16.mxu0 %v1465
    %1983 = vmatmul.mubr.bf16.gmra.mrb[0].mxu0 %v1464
    %v1984 = vpop.f32.mrb[0].mxu0
    %v1985 = vadd.f32 %v1824, %v1984
    %v1986 = vpop.f32.mrb[0].mxu0
    %v1987 = vpop.f32.mrb[0].mxu0
    %v1988 = vadd.f32 %v1827, %v1987
    %v1989 = vpop.f32.mrb[0].mxu0
    %1990 = vmatprep.mubr.bf16.mxu0 %v1469
    %1991 = vmatmul.mubr.bf16.gmra.mrb[0].mxu0 %v1468
    %v1992 = vpop.f32.mrb[0].mxu0
    %v1993 = vadd.f32 %v1832, %v1992
    %v1994 = vpop.f32.mrb[0].mxu0
    %v1995 = vpop.f32.mrb[0].mxu0
    %v1996 = vadd.f32 %v1835, %v1995
    %v1997 = vpop.f32.mrb[0].mxu0
    %1998 = vmatprep.mubr.bf16.mxu0 %v1473
    %1999 = vmatmul.mubr.bf16.gmra.mrb[0].mxu0 %v1472
    %v2000 = vpop.f32.mrb[0].mxu0
    %v2001 = vadd.f32 %v1840, %v2000
    %v2002 = vpop.f32.mrb[0].mxu0
    %v2003 = vpop.f32.mrb[0].mxu0
    %v2004 = vadd.f32 %v1843, %v2003
    %v2005 = vpop.f32.mrb[0].mxu0
    %2006 = vmatprep.mubr.bf16.mxu0 %v1477
    %2007 = vmatmul.mubr.bf16.gmra.mrb[0].mxu0 %v1476
    %v2008 = vpop.f32.mrb[0].mxu0
    %v2009 = vadd.f32 %v1848, %v2008
    %v2010 = vpop.f32.mrb[0].mxu0
    %v2011 = vpop.f32.mrb[0].mxu0
    %v2012 = vadd.f32 %v1851, %v2011
    %v2013 = vpop.f32.mrb[0].mxu0
    %2014 = vmatprep.mubr.bf16.mxu0 %v1481
    %2015 = vmatmul.mubr.bf16.gmra.mrb[0].mxu0 %v1480
    %v2016 = vpop.f32.mrb[0].mxu0
    %v2017 = vadd.f32 %v1856, %v2016
    %v2018 = vpop.f32.mrb[0].mxu0
    %v2019 = vpop.f32.mrb[0].mxu0
    %v2020 = vadd.f32 %v1859, %v2019
    %v2021 = vpop.f32.mrb[0].mxu0
    %2022 = vmatprep.mubr.bf16.mxu0 %v1485
    %2023 = vmatmul.mubr.bf16.gmra.mrb[0].mxu0 %v1484
    %v2024 = vpop.f32.mrb[0].mxu0
    %v2025 = vadd.f32 %v1864, %v2024
    %v2026 = vpop.f32.mrb[0].mxu0
    %v2027 = vpop.f32.mrb[0].mxu0
    %v2028 = vadd.f32 %v1867, %v2027
    %v2029 = vpop.f32.mrb[0].mxu0
    %2030 = vmatprep.mubr.bf16.mxu0 %v1489
    %2031 = vmatmul.mubr.bf16.gmra.mrb[0].mxu0 %v1488
    %v2032 = vpop.f32.mrb[0].mxu0
    %v2033 = vadd.f32 %v1872, %v2032
    %v2034 = vpop.f32.mrb[0].mxu0
    %v2035 = vpop.f32.mrb[0].mxu0
    %v2036 = vadd.f32 %v1875, %v2035
    %v2037 = vpop.f32.mrb[0].mxu0
    %2038 = vmatprep.mubr.bf16.mxu0 %v1493
    %2039 = vmatmul.mubr.bf16.gmra.mrb[0].mxu0 %v1492
    %v2040 = vpop.f32.mrb[0].mxu0
    %v2041 = vadd.f32 %v1880, %v2040
    %v2042 = vpop.f32.mrb[0].mxu0
    %v2043 = vpop.f32.mrb[0].mxu0
    %v2044 = vadd.f32 %v1883, %v2043
    %v2045 = vpop.f32.mrb[0].mxu0
    %2046 = vmatprep.mubr.bf16.mxu0 %v1497
    %2047 = vmatmul.mubr.bf16.gmra.mrb[0].mxu0 %v1496
    %v2048 = vpop.f32.mrb[0].mxu0
    %v2049 = vadd.f32 %v1888, %v2048
    %v2050 = vpop.f32.mrb[0].mxu0
    %v2051 = vpop.f32.mrb[0].mxu0
    %v2052 = vadd.f32 %v1891, %v2051
    %v2053 = vpop.f32.mrb[0].mxu0
    %2054 = vmatprep.mubr.bf16.mxu0 %v1501
    %2055 = vmatmul.mubr.bf16.gmra.mrb[0].mxu0 %v1500
    %v2056 = vpop.f32.mrb[0].mxu0
    %v2057 = vadd.f32 %v1896, %v2056
    %v2058 = vpop.f32.mrb[0].mxu0
    %v2059 = vpop.f32.mrb[0].mxu0
    %v2060 = vadd.f32 %v1899, %v2059
    %v2061 = vpop.f32.mrb[0].mxu0
    %2062 = vmatprep.mubr.bf16.mxu0 %v1505
    %2063 = vmatmul.mubr.bf16.gmra.mrb[0].mxu0 %v1504
    %v2064 = vpop.f32.mrb[0].mxu0
    %v2065 = vadd.f32 %v1904, %v2064
    %v2066 = vpop.f32.mrb[0].mxu0
    %v2067 = vpop.f32.mrb[0].mxu0
    %v2068 = vadd.f32 %v1907, %v2067
    %v2069 = vpop.f32.mrb[0].mxu0
    %2070 = vmatprep.mubr.bf16.mxu0 %v1509
    %2071 = vmatmul.mubr.bf16.gmra.mrb[0].mxu0 %v1508
    %v2072 = vpop.f32.mrb[0].mxu0
    %v2073 = vadd.f32 %v1912, %v2072
    %v2074 = vpop.f32.mrb[0].mxu0
    %v2075 = vpop.f32.mrb[0].mxu0
    %v2076 = vadd.f32 %v1915, %v2075
    %v2077 = vpop.f32.mrb[0].mxu0
    %2078 = vmatprep.mubr.bf16.mxu0 %v1513
    %2079 = vmatmul.mubr.bf16.gmra.mrb[0].mxu0 %v1512
    %v2080 = vpop.f32.mrb[0].mxu0
    %v2081 = vadd.f32 %v1920, %v2080
    %v2082 = vpop.f32.mrb[0].mxu0
    %v2083 = vpop.f32.mrb[0].mxu0
    %v2084 = vadd.f32 %v1923, %v2083
    %v2085 = vpop.f32.mrb[0].mxu0
    %2086 = vmatprep.mubr.bf16.mxu0 %v1517
    %2087 = vmatmul.mubr.bf16.gmra.mrb[0].mxu0 %v1516
    %v2088 = vpop.f32.mrb[0].mxu0
    %v2089 = vadd.f32 %v1928, %v2088
    %v2090 = vpop.f32.mrb[0].mxu0
    %v2091 = vpop.f32.mrb[0].mxu0
    %v2092 = vadd.f32 %v1931, %v2091
    %v2093 = vpop.f32.mrb[0].mxu0
    %2094 = vmatprep.mubr.bf16.mxu0 %v1521
    %2095 = vmatmul.mubr.bf16.gmra.mrb[0].mxu0 %v1520
    %v2096 = vpop.f32.mrb[0].mxu0
    %v2097 = vadd.f32 %v1936, %v2096
    %v2098 = vpop.f32.mrb[0].mxu0
    %v2099 = vpop.f32.mrb[0].mxu0
    %v2100 = vadd.f32 %v1939, %v2099
    %v2101 = vpop.f32.mrb[0].mxu0
    %2102 = vmatprep.mubr.bf16.mxu0 %v1525
    %2103 = vmatmul.mubr.bf16.gmra.mrb[0].mxu0 %v1524
    %v2104 = vpop.f32.mrb[0].mxu0
    %v2105 = vadd.f32 %v1944, %v2104
    %v2106 = vpop.f32.mrb[0].mxu0
    %v2107 = vpop.f32.mrb[0].mxu0
    %v2108 = vadd.f32 %v1947, %v2107
    %v2109 = vpop.f32.mrb[0].mxu0
    %2110 = vdwg.mxu0
    %2111 = vst [vmem:[#allocation7] sm:$0xff] %v1985
    %2112 = vst [vmem:[#allocation7 + $0x8] sm:$0xff] %v1988
    %2113 = vst [vmem:[#allocation7 + $0x10] sm:$0xff] %v1993
    %2114 = vst [vmem:[#allocation7 + $0x18] sm:$0xff] %v1996
    %2115 = vst [vmem:[#allocation7 + $0x20] sm:$0xff] %v2001
    %2116 = vst [vmem:[#allocation7 + $0x28] sm:$0xff] %v2004
    %2117 = vst [vmem:[#allocation7 + $0x30] sm:$0xff] %v2009
    %2118 = vst [vmem:[#allocation7 + $0x38] sm:$0xff] %v2012
    %2119 = vst [vmem:[#allocation7 + $0x40] sm:$0xff] %v2017
    %2120 = vst [vmem:[#allocation7 + $0x48] sm:$0xff] %v2020
    %2121 = vst [vmem:[#allocation7 + $0x50] sm:$0xff] %v2025
    %2122 = vst [vmem:[#allocation7 + $0x58] sm:$0xff] %v2028
    %2123 = vst [vmem:[#allocation7 + $0x60] sm:$0xff] %v2033
    %2124 = vst [vmem:[#allocation7 + $0x68] sm:$0xff] %v2036
    %2125 = vst [vmem:[#allocation7 + $0x70] sm:$0xff] %v2041
    %2126 = vst [vmem:[#allocation7 + $0x78] sm:$0xff] %v2044
    %2127 = vst [vmem:[#allocation7 + $0x80] sm:$0xff] %v2049
    %2128 = vst [vmem:[#allocation7 + $0x88] sm:$0xff] %v2052
    %2129 = vst [vmem:[#allocation7 + $0x90] sm:$0xff] %v2057
    %2130 = vst [vmem:[#allocation7 + $0x98] sm:$0xff] %v2060
    %2131 = vst [vmem:[#allocation7 + $0xa0] sm:$0xff] %v2065
    %2132 = vst [vmem:[#allocation7 + $0xa8] sm:$0xff] %v2068
    %2133 = vst [vmem:[#allocation7 + $0xb0] sm:$0xff] %v2073
    %2134 = vst [vmem:[#allocation7 + $0xb8] sm:$0xff] %v2076
    %2135 = vst [vmem:[#allocation7 + $0xc0] sm:$0xff] %v2081
    %2136 = vst [vmem:[#allocation7 + $0xc8] sm:$0xff] %v2084
    %2137 = vst [vmem:[#allocation7 + $0xd0] sm:$0xff] %v2089
    %2138 = vst [vmem:[#allocation7 + $0xd8] sm:$0xff] %v2092
    %2139 = vst [vmem:[#allocation7 + $0xe0] sm:$0xff] %v2097
    %2140 = vst [vmem:[#allocation7 + $0xe8] sm:$0xff] %v2100
    %2141 = vst [vmem:[#allocation7 + $0xf0] sm:$0xff] %v2105
    %2142 = vst [vmem:[#allocation7 + $0xf8] sm:$0xff] %v2108
    // Predicated region
    $region38: #{tpu_custom_call.1} parent=1 // pred_check
      _
    $region39: #{tpu_custom_call.1} parent=1 // pred_check_branch
      %2144 = sbr.rel (0) target = $region41
    $region40: #{tpu_custom_call.1} parent=1 // pred_region
      %s2146 = ssub.s32 4096, 4096
      %2147 = vsyncadd [#allocation4], %s2146
      %s2148 = sshll.u32 [#allocation7], 4
      %s2149 = int_to_ptr.vmem [resolvable:$true] %s2148
      %2154 = dma.vmem_to_hbm [thread:$0]  %s2149, 4096, %s7, [#allocation4], 128, 128, 8
    $region41: #{tpu_custom_call.1} parent=1 // pred_fallthru
      _
    // Predicated region
    $region42: #{tpu_custom_call.1} parent=1 // pred_check
      _
    $region43: #{tpu_custom_call.1} parent=1 // pred_check_branch
      %2156 = sbr.rel (0) target = $region45
    $region44: #{tpu_custom_call.1} parent=1 // pred_region
      %2157 = dma.done [#allocation4], 4096
    $region45: #{tpu_custom_call.1} parent=1 // pred_fallthru
      _
    %2158 = vsyncpa [#allocation3], 1
    %2159 = vsyncpa [#allocation6], 1
    %2160 = vsyncpa [#allocation4], 1

</llo_original>
